<compile_context>
chip_gen: v7x
topology: tpu7x:2x2x1
jax: 0.10.0
libtpu: 0.0.40
codegen_flags: <defaults>
</compile_context>

<pallas_src>
import functools

import jax
import jax.numpy as jnp
from jax import lax
from jax.experimental import pallas as pl
from jax.experimental.pallas import tpu as pltpu


# ---------------------------------------------------------------------------
# Fused kernel: one grid step = all batches, all heads, all projections
# ---------------------------------------------------------------------------
def _mha_fused_kernel(x_ref, wkqv_ref, wz_ref, bz_ref, o_ref, *,
                      batch, num_heads, dp, compute_dtype):
    # x_ref    : (B*S, D)
    # wkqv_ref : (D, 3*H*DP)   [K heads | Q heads | V heads], zero-padded per head
    # wz_ref   : (H*DP, D)     Z weight, (in, out) layout, zero-padded rows
    # bz_ref   : (1, D)
    # o_ref    : (B*S, D)
    BS, D = x_ref.shape
    B, H, DP = batch, num_heads, dp
    S = BS // B
    HDP = H * DP

    x = x_ref[...].astype(compute_dtype)          # (BS, D)
    wkqv = wkqv_ref[...].astype(compute_dtype)    # (D, 3*H*DP)
    wz = wz_ref[...].astype(compute_dtype)        # (H*DP, D)
    bz = bz_ref[...]                              # (1, D) f32

    # One wide MXU matmul: all batch rows x all heads' K|Q|V projections.
    proj = jnp.dot(x, wkqv, preferred_element_type=jnp.float32)   # (BS, 3*H*DP) f32
    proj = proj.astype(compute_dtype)             # cast hoisted out of the loops

    kqt_dims = (((1,), (1,)), ((), ()))           # contract last dims: k @ q^T

    for b in range(B):        # static unroll; per-batch (S, S) attention
        r0 = b * S
        y = jnp.zeros((S, D), dtype=jnp.float32)
        for h in range(H):    # static unroll; all slices are 128-lane aligned
            k = proj[r0:r0 + S, h * DP:(h + 1) * DP]                       # (S, DP)
            q = proj[r0:r0 + S, HDP + h * DP:HDP + (h + 1) * DP]           # scale folded
            v = proj[r0:r0 + S, 2 * HDP + h * DP:2 * HDP + (h + 1) * DP]   # (S, DP)

            # Module semantics: scores = K(x) @ Q(x)^T (already /sqrt(D) via Q weights).
            s = lax.dot_general(k, q, kqt_dims,
                                preferred_element_type=jnp.float32)        # (S, S) f32
            s = s - jnp.max(s, axis=-1, keepdims=True)
            p = jnp.exp(s)
            att = p * pl.reciprocal(jnp.sum(p, axis=-1, keepdims=True), approx=True)

            av = jnp.dot(att.astype(compute_dtype), v,
                         preferred_element_type=jnp.float32)               # (S, DP)
            # Per-head accumulation of the Z projection (no concat / relayout).
            y = y + jnp.dot(av.astype(compute_dtype), wz[h * DP:(h + 1) * DP, :],
                            preferred_element_type=jnp.float32)            # (S, D)
        o_ref[r0:r0 + S, :] = (y + bz).astype(o_ref.dtype)


# ---------------------------------------------------------------------------
# One-time parameter preparation (hoisted out of the per-call path)
# ---------------------------------------------------------------------------
def prepare_params(params, *, lane=128):
    """params = (wk, wq, wv, wz, bz) in PyTorch layout:
       wk/wq/wv: (H, D, D) per-head Linear weights (out, in);
       wz: (D, H*D) Z Linear weight (out, in); bz: (D,)."""
    wk, wq, wv, wz, bz = params
    H, D, _ = wk.shape
    DP = ((D + lane - 1) // lane) * lane          # per-head block, lane-aligned
    pad = DP - D
    f32 = jnp.float32

    wk_t = jnp.transpose(wk, (0, 2, 1)).astype(f32)                      # (H, in, out)
    wq_t = jnp.transpose(wq, (0, 2, 1)).astype(f32) / jnp.sqrt(f32(D))   # fold 1/sqrt(D)
    wv_t = jnp.transpose(wv, (0, 2, 1)).astype(f32)

    def to_wide(w):   # (H, D, D) -> (D, H*DP), each head zero-padded to DP lanes
        w = jnp.pad(w, ((0, 0), (0, 0), (0, pad)))
        return jnp.transpose(w, (1, 0, 2)).reshape(D, H * DP)

    wkqv = jnp.concatenate([to_wide(wk_t), to_wide(wq_t), to_wide(wv_t)], axis=1)

    wz_t = wz.T.astype(f32).reshape(H, D, D)                # per head (in, out)
    wz_pad = jnp.pad(wz_t, ((0, 0), (0, pad), (0, 0))).reshape(H * DP, D)
    bz2 = bz.reshape(1, D).astype(f32)
    return wkqv, wz_pad, bz2, H, DP


# ---------------------------------------------------------------------------
# Forward wrapper
# ---------------------------------------------------------------------------
def multi_head_attention_forward(x, prepared, *, compute_dtype=jnp.bfloat16):
    """x: (B, S, D). prepared = prepare_params(params).
    compute_dtype controls the MXU operand dtype (accumulation & softmax stay f32)."""
    wkqv, wz_pad, bz2, H, DP = prepared
    B, S, D = x.shape
    BS = B * S
    x2d = x.reshape(BS, D)     # fold batch: one projection matmul, one grid step

    kernel = functools.partial(_mha_fused_kernel, batch=B, num_heads=H, dp=DP,
                               compute_dtype=compute_dtype)

    out2d = pl.pallas_call(
        kernel,
        out_shape=jax.ShapeDtypeStruct((BS, D), x.dtype),
        grid_spec=pltpu.PrefetchScalarGridSpec(
            num_scalar_prefetch=0,
            grid=(1,),
            in_specs=[
                pl.BlockSpec((BS, D), lambda i: (0, 0)),
                pl.BlockSpec(wkqv.shape, lambda i: (0, 0)),
                pl.BlockSpec(wz_pad.shape, lambda i: (0, 0)),
                pl.BlockSpec((1, D), lambda i: (0, 0)),
            ],
            out_specs=pl.BlockSpec((BS, D), lambda i: (0, 0)),
        ),
        compiler_params=pltpu.CompilerParams(
            dimension_semantics=("arbitrary",)),
    )(x2d, wkqv, wz_pad, bz2)
    return out2d.reshape(B, S, D)


# ---------------------------------------------------------------------------
# Pure-JAX reference for validation
# ---------------------------------------------------------------------------
def reference_forward(x, params):
    wk, wq, wv, wz, bz = params
    D = x.shape[-1]
    H = wk.shape[0]
    outs = []
    for h in range(H):
        k = x @ wk[h].T
        q = x @ wq[h].T
        v = x @ wv[h].T
        scores = (k @ jnp.swapaxes(q, -2, -1)) / jnp.sqrt(jnp.float32(D))
        att = jax.nn.softmax(scores, axis=-1)
        outs.append(att @ v)
    concat = jnp.concatenate(outs, axis=-1)
    return concat @ wz.T + bz


if __name__ == "__main__":
    # Small shapes consistent with the module
    B, S, D, H = 2, 8, 32, 4

    key = jax.random.PRNGKey(0)
    kx, kk, kq, kv, kz, kb = jax.random.split(key, 6)

    x = jax.random.normal(kx, (B, S, D), dtype=jnp.float32)

    # Deterministic parameter init (shapes from the module __init__):
    #   per-head K/Q/V: Linear(D, D, bias=False) -> weight (D, D)
    #   Z: Linear(H*D, D) -> weight (D, H*D), bias (D,)
    scale = 1.0 / jnp.sqrt(jnp.float32(D))
    wk = jax.random.uniform(kk, (H, D, D), jnp.float32, -scale, scale)
    wq = jax.random.uniform(kq, (H, D, D), jnp.float32, -scale, scale)
    wv = jax.random.uniform(kv, (H, D, D), jnp.float32, -scale, scale)
    zscale = 1.0 / jnp.sqrt(jnp.float32(H * D))
    wz = jax.random.uniform(kz, (D, H * D), jnp.float32, -zscale, zscale)
    bz = jax.random.uniform(kb, (D,), jnp.float32, -zscale, zscale)

    params = (wk, wq, wv, wz, bz)
    prepared = prepare_params(params)   # one-time weight prep (not per-call)

    ref = reference_forward(x, params)

    # f32 MXU operands: tight check (only the EUP approx reciprocal differs).
    out_f32 = multi_head_attention_forward(x, prepared, compute_dtype=jnp.float32)
    out_f32 = jax.block_until_ready(out_f32)
    assert out_f32.shape == (B, S, D)
    assert jnp.allclose(out_f32, ref, atol=5e-3, rtol=5e-3), "f32 path mismatch"

    # Default bf16 MXU operands (f32 accumulation / softmax): looser tolerance.
    out_bf16 = multi_head_attention_forward(x, prepared)
    out_bf16 = jax.block_until_ready(out_bf16)
    assert out_bf16.shape == (B, S, D)
    assert jnp.allclose(out_bf16, ref, atol=5e-2, rtol=5e-2), "bf16 path mismatch"

    print("KERNEL_OK")
</pallas_src>

<mosaic_0001>
module attributes {stable_mosaic.version = 11 : i64} {
  func.func @_mha_fused_kernel(%arg0: i32, %arg1: memref<16x32xf32, #tpu.memory_space<vmem>>, %arg2: memref<32x1536xf32, #tpu.memory_space<vmem>>, %arg3: memref<512x32xf32, #tpu.memory_space<vmem>>, %arg4: memref<1x32xf32, #tpu.memory_space<vmem>>, %arg5: memref<16x32xf32, #tpu.memory_space<vmem>>) attributes {dimension_semantics = [#tpu.dimension_semantics<arbitrary>], iteration_bounds = array<i64: 1>, scalar_prefetch = 0 : i64, scratch_operands = 0 : i64, tpu.core_type = #tpu.core_type<tc>, window_params = [{pipeline_mode = #tpu.pipeline_mode<synchronous>, transform_indices = @transform_0, window_bounds = array<i64: 16, 32>}, {pipeline_mode = #tpu.pipeline_mode<synchronous>, transform_indices = @transform_1, window_bounds = array<i64: 32, 1536>}, {pipeline_mode = #tpu.pipeline_mode<synchronous>, transform_indices = @transform_2, window_bounds = array<i64: 512, 32>}, {pipeline_mode = #tpu.pipeline_mode<synchronous>, transform_indices = @transform_3, window_bounds = array<i64: 1, 32>}, {pipeline_mode = #tpu.pipeline_mode<synchronous>, transform_indices = @transform_4, window_bounds = array<i64: 16, 32>}]} {
    %c0 = arith.constant 0 : index
    %c0_0 = arith.constant 0 : index
    %0 = vector.load %arg1[%c0, %c0_0] : memref<16x32xf32, #tpu.memory_space<vmem>>, vector<16x32xf32>
    %c0_1 = arith.constant 0 : index
    %c0_2 = arith.constant 0 : index
    %1 = vector.load %arg2[%c0_1, %c0_2] : memref<32x1536xf32, #tpu.memory_space<vmem>>, vector<32x1536xf32>
    %c0_3 = arith.constant 0 : index
    %c0_4 = arith.constant 0 : index
    %2 = vector.load %arg3[%c0_3, %c0_4] : memref<512x32xf32, #tpu.memory_space<vmem>>, vector<512x32xf32>
    %c0_5 = arith.constant 0 : index
    %c0_6 = arith.constant 0 : index
    %3 = vector.load %arg4[%c0_5, %c0_6] : memref<1x32xf32, #tpu.memory_space<vmem>>, vector<1x32xf32>
    %cst = arith.constant dense<0.000000e+00> : vector<16x1536xf32>
    %4 = tpu.matmul %0, %1, %cst {dimension_numbers = #tpu.dot_dimension_numbers<[1], [0], [0], [1], [0, 0, 1, 1], [], []>} : vector<16x32xf32>, vector<32x1536xf32>, vector<16x1536xf32> -> vector<16x1536xf32>
    %cst_7 = arith.constant 0.000000e+00 : f32
    %5 = vector.broadcast %cst_7 : f32 to vector<8x32xf32>
    %6 = vector.extract_strided_slice %4 {offsets = [0, 0], sizes = [8, 128], strides = [1, 1]} : vector<16x1536xf32> to vector<8x128xf32>
    %7 = vector.extract_strided_slice %4 {offsets = [0, 512], sizes = [8, 128], strides = [1, 1]} : vector<16x1536xf32> to vector<8x128xf32>
    %8 = vector.extract_strided_slice %4 {offsets = [0, 1024], sizes = [8, 128], strides = [1, 1]} : vector<16x1536xf32> to vector<8x128xf32>
    %cst_8 = arith.constant dense<0.000000e+00> : vector<8x8xf32>
    %9 = tpu.matmul %6, %7, %cst_8 {dimension_numbers = #tpu.dot_dimension_numbers<[1], [1], [0], [0], [0, 0, 1, 0], [], []>} : vector<8x128xf32>, vector<8x128xf32>, vector<8x8xf32> -> vector<8x8xf32>
    %cst_9 = arith.constant dense<0xFF800000> : vector<8xf32>
    %10 = vector.multi_reduction <maximumf>, %9, %cst_9 [1] : vector<8x8xf32> to vector<8xf32>
    %11 = vector.shape_cast %10 : vector<8xf32> to vector<8x1xf32>
    %12 = vector.broadcast %11 : vector<8x1xf32> to vector<8x8xf32>
    %13 = arith.subf %9, %12 : vector<8x8xf32>
    %14 = math.exp %13 : vector<8x8xf32>
    %cst_10 = arith.constant dense<0.000000e+00> : vector<8xf32>
    %15 = vector.multi_reduction <add>, %14, %cst_10 [1] : vector<8x8xf32> to vector<8xf32>
    %16 = vector.shape_cast %15 : vector<8xf32> to vector<8x1xf32>
    %17 = tpu.reciprocal %16 {approx = true} : vector<8x1xf32> -> vector<8x1xf32>
    %18 = vector.broadcast %17 : vector<8x1xf32> to vector<8x8xf32>
    %19 = arith.mulf %14, %18 : vector<8x8xf32>
    %cst_11 = arith.constant dense<0.000000e+00> : vector<8x128xf32>
    %20 = tpu.matmul %19, %8, %cst_11 {dimension_numbers = #tpu.dot_dimension_numbers<[1], [0], [0], [1], [0, 0, 1, 1], [], []>} : vector<8x8xf32>, vector<8x128xf32>, vector<8x128xf32> -> vector<8x128xf32>
    %21 = vector.extract_strided_slice %2 {offsets = [0, 0], sizes = [128, 32], strides = [1, 1]} : vector<512x32xf32> to vector<128x32xf32>
    %cst_12 = arith.constant dense<0.000000e+00> : vector<8x32xf32>
    %22 = tpu.matmul %20, %21, %cst_12 {dimension_numbers = #tpu.dot_dimension_numbers<[1], [0], [0], [1], [0, 0, 1, 1], [], []>} : vector<8x128xf32>, vector<128x32xf32>, vector<8x32xf32> -> vector<8x32xf32>
    %23 = arith.addf %5, %22 : vector<8x32xf32>
    %24 = vector.extract_strided_slice %4 {offsets = [0, 128], sizes = [8, 128], strides = [1, 1]} : vector<16x1536xf32> to vector<8x128xf32>
    %25 = vector.extract_strided_slice %4 {offsets = [0, 640], sizes = [8, 128], strides = [1, 1]} : vector<16x1536xf32> to vector<8x128xf32>
    %26 = vector.extract_strided_slice %4 {offsets = [0, 1152], sizes = [8, 128], strides = [1, 1]} : vector<16x1536xf32> to vector<8x128xf32>
    %cst_13 = arith.constant dense<0.000000e+00> : vector<8x8xf32>
    %27 = tpu.matmul %24, %25, %cst_13 {dimension_numbers = #tpu.dot_dimension_numbers<[1], [1], [0], [0], [0, 0, 1, 0], [], []>} : vector<8x128xf32>, vector<8x128xf32>, vector<8x8xf32> -> vector<8x8xf32>
    %cst_14 = arith.constant dense<0xFF800000> : vector<8xf32>
    %28 = vector.multi_reduction <maximumf>, %27, %cst_14 [1] : vector<8x8xf32> to vector<8xf32>
    %29 = vector.shape_cast %28 : vector<8xf32> to vector<8x1xf32>
    %30 = vector.broadcast %29 : vector<8x1xf32> to vector<8x8xf32>
    %31 = arith.subf %27, %30 : vector<8x8xf32>
    %32 = math.exp %31 : vector<8x8xf32>
    %cst_15 = arith.constant dense<0.000000e+00> : vector<8xf32>
    %33 = vector.multi_reduction <add>, %32, %cst_15 [1] : vector<8x8xf32> to vector<8xf32>
    %34 = vector.shape_cast %33 : vector<8xf32> to vector<8x1xf32>
    %35 = tpu.reciprocal %34 {approx = true} : vector<8x1xf32> -> vector<8x1xf32>
    %36 = vector.broadcast %35 : vector<8x1xf32> to vector<8x8xf32>
    %37 = arith.mulf %32, %36 : vector<8x8xf32>
    %cst_16 = arith.constant dense<0.000000e+00> : vector<8x128xf32>
    %38 = tpu.matmul %37, %26, %cst_16 {dimension_numbers = #tpu.dot_dimension_numbers<[1], [0], [0], [1], [0, 0, 1, 1], [], []>} : vector<8x8xf32>, vector<8x128xf32>, vector<8x128xf32> -> vector<8x128xf32>
    %39 = vector.extract_strided_slice %2 {offsets = [128, 0], sizes = [128, 32], strides = [1, 1]} : vector<512x32xf32> to vector<128x32xf32>
    %cst_17 = arith.constant dense<0.000000e+00> : vector<8x32xf32>
    %40 = tpu.matmul %38, %39, %cst_17 {dimension_numbers = #tpu.dot_dimension_numbers<[1], [0], [0], [1], [0, 0, 1, 1], [], []>} : vector<8x128xf32>, vector<128x32xf32>, vector<8x32xf32> -> vector<8x32xf32>
    %41 = arith.addf %23, %40 : vector<8x32xf32>
    %42 = vector.extract_strided_slice %4 {offsets = [0, 256], sizes = [8, 128], strides = [1, 1]} : vector<16x1536xf32> to vector<8x128xf32>
    %43 = vector.extract_strided_slice %4 {offsets = [0, 768], sizes = [8, 128], strides = [1, 1]} : vector<16x1536xf32> to vector<8x128xf32>
    %44 = vector.extract_strided_slice %4 {offsets = [0, 1280], sizes = [8, 128], strides = [1, 1]} : vector<16x1536xf32> to vector<8x128xf32>
    %cst_18 = arith.constant dense<0.000000e+00> : vector<8x8xf32>
    %45 = tpu.matmul %42, %43, %cst_18 {dimension_numbers = #tpu.dot_dimension_numbers<[1], [1], [0], [0], [0, 0, 1, 0], [], []>} : vector<8x128xf32>, vector<8x128xf32>, vector<8x8xf32> -> vector<8x8xf32>
    %cst_19 = arith.constant dense<0xFF800000> : vector<8xf32>
    %46 = vector.multi_reduction <maximumf>, %45, %cst_19 [1] : vector<8x8xf32> to vector<8xf32>
    %47 = vector.shape_cast %46 : vector<8xf32> to vector<8x1xf32>
    %48 = vector.broadcast %47 : vector<8x1xf32> to vector<8x8xf32>
    %49 = arith.subf %45, %48 : vector<8x8xf32>
    %50 = math.exp %49 : vector<8x8xf32>
    %cst_20 = arith.constant dense<0.000000e+00> : vector<8xf32>
    %51 = vector.multi_reduction <add>, %50, %cst_20 [1] : vector<8x8xf32> to vector<8xf32>
    %52 = vector.shape_cast %51 : vector<8xf32> to vector<8x1xf32>
    %53 = tpu.reciprocal %52 {approx = true} : vector<8x1xf32> -> vector<8x1xf32>
    %54 = vector.broadcast %53 : vector<8x1xf32> to vector<8x8xf32>
    %55 = arith.mulf %50, %54 : vector<8x8xf32>
    %cst_21 = arith.constant dense<0.000000e+00> : vector<8x128xf32>
    %56 = tpu.matmul %55, %44, %cst_21 {dimension_numbers = #tpu.dot_dimension_numbers<[1], [0], [0], [1], [0, 0, 1, 1], [], []>} : vector<8x8xf32>, vector<8x128xf32>, vector<8x128xf32> -> vector<8x128xf32>
    %57 = vector.extract_strided_slice %2 {offsets = [256, 0], sizes = [128, 32], strides = [1, 1]} : vector<512x32xf32> to vector<128x32xf32>
    %cst_22 = arith.constant dense<0.000000e+00> : vector<8x32xf32>
    %58 = tpu.matmul %56, %57, %cst_22 {dimension_numbers = #tpu.dot_dimension_numbers<[1], [0], [0], [1], [0, 0, 1, 1], [], []>} : vector<8x128xf32>, vector<128x32xf32>, vector<8x32xf32> -> vector<8x32xf32>
    %59 = arith.addf %41, %58 : vector<8x32xf32>
    %60 = vector.extract_strided_slice %4 {offsets = [0, 384], sizes = [8, 128], strides = [1, 1]} : vector<16x1536xf32> to vector<8x128xf32>
    %61 = vector.extract_strided_slice %4 {offsets = [0, 896], sizes = [8, 128], strides = [1, 1]} : vector<16x1536xf32> to vector<8x128xf32>
    %62 = vector.extract_strided_slice %4 {offsets = [0, 1408], sizes = [8, 128], strides = [1, 1]} : vector<16x1536xf32> to vector<8x128xf32>
    %cst_23 = arith.constant dense<0.000000e+00> : vector<8x8xf32>
    %63 = tpu.matmul %60, %61, %cst_23 {dimension_numbers = #tpu.dot_dimension_numbers<[1], [1], [0], [0], [0, 0, 1, 0], [], []>} : vector<8x128xf32>, vector<8x128xf32>, vector<8x8xf32> -> vector<8x8xf32>
    %cst_24 = arith.constant dense<0xFF800000> : vector<8xf32>
    %64 = vector.multi_reduction <maximumf>, %63, %cst_24 [1] : vector<8x8xf32> to vector<8xf32>
    %65 = vector.shape_cast %64 : vector<8xf32> to vector<8x1xf32>
    %66 = vector.broadcast %65 : vector<8x1xf32> to vector<8x8xf32>
    %67 = arith.subf %63, %66 : vector<8x8xf32>
    %68 = math.exp %67 : vector<8x8xf32>
    %cst_25 = arith.constant dense<0.000000e+00> : vector<8xf32>
    %69 = vector.multi_reduction <add>, %68, %cst_25 [1] : vector<8x8xf32> to vector<8xf32>
    %70 = vector.shape_cast %69 : vector<8xf32> to vector<8x1xf32>
    %71 = tpu.reciprocal %70 {approx = true} : vector<8x1xf32> -> vector<8x1xf32>
    %72 = vector.broadcast %71 : vector<8x1xf32> to vector<8x8xf32>
    %73 = arith.mulf %68, %72 : vector<8x8xf32>
    %cst_26 = arith.constant dense<0.000000e+00> : vector<8x128xf32>
    %74 = tpu.matmul %73, %62, %cst_26 {dimension_numbers = #tpu.dot_dimension_numbers<[1], [0], [0], [1], [0, 0, 1, 1], [], []>} : vector<8x8xf32>, vector<8x128xf32>, vector<8x128xf32> -> vector<8x128xf32>
    %75 = vector.extract_strided_slice %2 {offsets = [384, 0], sizes = [128, 32], strides = [1, 1]} : vector<512x32xf32> to vector<128x32xf32>
    %cst_27 = arith.constant dense<0.000000e+00> : vector<8x32xf32>
    %76 = tpu.matmul %74, %75, %cst_27 {dimension_numbers = #tpu.dot_dimension_numbers<[1], [0], [0], [1], [0, 0, 1, 1], [], []>} : vector<8x128xf32>, vector<128x32xf32>, vector<8x32xf32> -> vector<8x32xf32>
    %77 = arith.addf %59, %76 : vector<8x32xf32>
    %78 = vector.broadcast %3 : vector<1x32xf32> to vector<8x32xf32>
    %79 = arith.addf %77, %78 : vector<8x32xf32>
    %c0_28 = arith.constant 0 : index
    %c0_29 = arith.constant 0 : index
    %80 = vector.load %arg5[%c0_28, %c0_29] : memref<16x32xf32, #tpu.memory_space<vmem>>, vector<8x32xf32>
    tpu.vector_store %arg5[%c0_28, %c0_29], %79 {strides = array<i32>} : memref<16x32xf32, #tpu.memory_space<vmem>>, vector<8x32xf32>,
    %cst_30 = arith.constant 0.000000e+00 : f32
    %81 = vector.broadcast %cst_30 : f32 to vector<8x32xf32>
    %82 = vector.extract_strided_slice %4 {offsets = [8, 0], sizes = [8, 128], strides = [1, 1]} : vector<16x1536xf32> to vector<8x128xf32>
    %83 = vector.extract_strided_slice %4 {offsets = [8, 512], sizes = [8, 128], strides = [1, 1]} : vector<16x1536xf32> to vector<8x128xf32>
    %84 = vector.extract_strided_slice %4 {offsets = [8, 1024], sizes = [8, 128], strides = [1, 1]} : vector<16x1536xf32> to vector<8x128xf32>
    %cst_31 = arith.constant dense<0.000000e+00> : vector<8x8xf32>
    %85 = tpu.matmul %82, %83, %cst_31 {dimension_numbers = #tpu.dot_dimension_numbers<[1], [1], [0], [0], [0, 0, 1, 0], [], []>} : vector<8x128xf32>, vector<8x128xf32>, vector<8x8xf32> -> vector<8x8xf32>
    %cst_32 = arith.constant dense<0xFF800000> : vector<8xf32>
    %86 = vector.multi_reduction <maximumf>, %85, %cst_32 [1] : vector<8x8xf32> to vector<8xf32>
    %87 = vector.shape_cast %86 : vector<8xf32> to vector<8x1xf32>
    %88 = vector.broadcast %87 : vector<8x1xf32> to vector<8x8xf32>
    %89 = arith.subf %85, %88 : vector<8x8xf32>
    %90 = math.exp %89 : vector<8x8xf32>
    %cst_33 = arith.constant dense<0.000000e+00> : vector<8xf32>
    %91 = vector.multi_reduction <add>, %90, %cst_33 [1] : vector<8x8xf32> to vector<8xf32>
    %92 = vector.shape_cast %91 : vector<8xf32> to vector<8x1xf32>
    %93 = tpu.reciprocal %92 {approx = true} : vector<8x1xf32> -> vector<8x1xf32>
    %94 = vector.broadcast %93 : vector<8x1xf32> to vector<8x8xf32>
    %95 = arith.mulf %90, %94 : vector<8x8xf32>
    %cst_34 = arith.constant dense<0.000000e+00> : vector<8x128xf32>
    %96 = tpu.matmul %95, %84, %cst_34 {dimension_numbers = #tpu.dot_dimension_numbers<[1], [0], [0], [1], [0, 0, 1, 1], [], []>} : vector<8x8xf32>, vector<8x128xf32>, vector<8x128xf32> -> vector<8x128xf32>
    %97 = vector.extract_strided_slice %2 {offsets = [0, 0], sizes = [128, 32], strides = [1, 1]} : vector<512x32xf32> to vector<128x32xf32>
    %cst_35 = arith.constant dense<0.000000e+00> : vector<8x32xf32>
    %98 = tpu.matmul %96, %97, %cst_35 {dimension_numbers = #tpu.dot_dimension_numbers<[1], [0], [0], [1], [0, 0, 1, 1], [], []>} : vector<8x128xf32>, vector<128x32xf32>, vector<8x32xf32> -> vector<8x32xf32>
    %99 = arith.addf %81, %98 : vector<8x32xf32>
    %100 = vector.extract_strided_slice %4 {offsets = [8, 128], sizes = [8, 128], strides = [1, 1]} : vector<16x1536xf32> to vector<8x128xf32>
    %101 = vector.extract_strided_slice %4 {offsets = [8, 640], sizes = [8, 128], strides = [1, 1]} : vector<16x1536xf32> to vector<8x128xf32>
    %102 = vector.extract_strided_slice %4 {offsets = [8, 1152], sizes = [8, 128], strides = [1, 1]} : vector<16x1536xf32> to vector<8x128xf32>
    %cst_36 = arith.constant dense<0.000000e+00> : vector<8x8xf32>
    %103 = tpu.matmul %100, %101, %cst_36 {dimension_numbers = #tpu.dot_dimension_numbers<[1], [1], [0], [0], [0, 0, 1, 0], [], []>} : vector<8x128xf32>, vector<8x128xf32>, vector<8x8xf32> -> vector<8x8xf32>
    %cst_37 = arith.constant dense<0xFF800000> : vector<8xf32>
    %104 = vector.multi_reduction <maximumf>, %103, %cst_37 [1] : vector<8x8xf32> to vector<8xf32>
    %105 = vector.shape_cast %104 : vector<8xf32> to vector<8x1xf32>
    %106 = vector.broadcast %105 : vector<8x1xf32> to vector<8x8xf32>
    %107 = arith.subf %103, %106 : vector<8x8xf32>
    %108 = math.exp %107 : vector<8x8xf32>
    %cst_38 = arith.constant dense<0.000000e+00> : vector<8xf32>
    %109 = vector.multi_reduction <add>, %108, %cst_38 [1] : vector<8x8xf32> to vector<8xf32>
    %110 = vector.shape_cast %109 : vector<8xf32> to vector<8x1xf32>
    %111 = tpu.reciprocal %110 {approx = true} : vector<8x1xf32> -> vector<8x1xf32>
    %112 = vector.broadcast %111 : vector<8x1xf32> to vector<8x8xf32>
    %113 = arith.mulf %108, %112 : vector<8x8xf32>
    %cst_39 = arith.constant dense<0.000000e+00> : vector<8x128xf32>
    %114 = tpu.matmul %113, %102, %cst_39 {dimension_numbers = #tpu.dot_dimension_numbers<[1], [0], [0], [1], [0, 0, 1, 1], [], []>} : vector<8x8xf32>, vector<8x128xf32>, vector<8x128xf32> -> vector<8x128xf32>
    %115 = vector.extract_strided_slice %2 {offsets = [128, 0], sizes = [128, 32], strides = [1, 1]} : vector<512x32xf32> to vector<128x32xf32>
    %cst_40 = arith.constant dense<0.000000e+00> : vector<8x32xf32>
    %116 = tpu.matmul %114, %115, %cst_40 {dimension_numbers = #tpu.dot_dimension_numbers<[1], [0], [0], [1], [0, 0, 1, 1], [], []>} : vector<8x128xf32>, vector<128x32xf32>, vector<8x32xf32> -> vector<8x32xf32>
    %117 = arith.addf %99, %116 : vector<8x32xf32>
    %118 = vector.extract_strided_slice %4 {offsets = [8, 256], sizes = [8, 128], strides = [1, 1]} : vector<16x1536xf32> to vector<8x128xf32>
    %119 = vector.extract_strided_slice %4 {offsets = [8, 768], sizes = [8, 128], strides = [1, 1]} : vector<16x1536xf32> to vector<8x128xf32>
    %120 = vector.extract_strided_slice %4 {offsets = [8, 1280], sizes = [8, 128], strides = [1, 1]} : vector<16x1536xf32> to vector<8x128xf32>
    %cst_41 = arith.constant dense<0.000000e+00> : vector<8x8xf32>
    %121 = tpu.matmul %118, %119, %cst_41 {dimension_numbers = #tpu.dot_dimension_numbers<[1], [1], [0], [0], [0, 0, 1, 0], [], []>} : vector<8x128xf32>, vector<8x128xf32>, vector<8x8xf32> -> vector<8x8xf32>
    %cst_42 = arith.constant dense<0xFF800000> : vector<8xf32>
    %122 = vector.multi_reduction <maximumf>, %121, %cst_42 [1] : vector<8x8xf32> to vector<8xf32>
    %123 = vector.shape_cast %122 : vector<8xf32> to vector<8x1xf32>
    %124 = vector.broadcast %123 : vector<8x1xf32> to vector<8x8xf32>
    %125 = arith.subf %121, %124 : vector<8x8xf32>
    %126 = math.exp %125 : vector<8x8xf32>
    %cst_43 = arith.constant dense<0.000000e+00> : vector<8xf32>
    %127 = vector.multi_reduction <add>, %126, %cst_43 [1] : vector<8x8xf32> to vector<8xf32>
    %128 = vector.shape_cast %127 : vector<8xf32> to vector<8x1xf32>
    %129 = tpu.reciprocal %128 {approx = true} : vector<8x1xf32> -> vector<8x1xf32>
    %130 = vector.broadcast %129 : vector<8x1xf32> to vector<8x8xf32>
    %131 = arith.mulf %126, %130 : vector<8x8xf32>
    %cst_44 = arith.constant dense<0.000000e+00> : vector<8x128xf32>
    %132 = tpu.matmul %131, %120, %cst_44 {dimension_numbers = #tpu.dot_dimension_numbers<[1], [0], [0], [1], [0, 0, 1, 1], [], []>} : vector<8x8xf32>, vector<8x128xf32>, vector<8x128xf32> -> vector<8x128xf32>
    %133 = vector.extract_strided_slice %2 {offsets = [256, 0], sizes = [128, 32], strides = [1, 1]} : vector<512x32xf32> to vector<128x32xf32>
    %cst_45 = arith.constant dense<0.000000e+00> : vector<8x32xf32>
    %134 = tpu.matmul %132, %133, %cst_45 {dimension_numbers = #tpu.dot_dimension_numbers<[1], [0], [0], [1], [0, 0, 1, 1], [], []>} : vector<8x128xf32>, vector<128x32xf32>, vector<8x32xf32> -> vector<8x32xf32>
    %135 = arith.addf %117, %134 : vector<8x32xf32>
    %136 = vector.extract_strided_slice %4 {offsets = [8, 384], sizes = [8, 128], strides = [1, 1]} : vector<16x1536xf32> to vector<8x128xf32>
    %137 = vector.extract_strided_slice %4 {offsets = [8, 896], sizes = [8, 128], strides = [1, 1]} : vector<16x1536xf32> to vector<8x128xf32>
    %138 = vector.extract_strided_slice %4 {offsets = [8, 1408], sizes = [8, 128], strides = [1, 1]} : vector<16x1536xf32> to vector<8x128xf32>
    %cst_46 = arith.constant dense<0.000000e+00> : vector<8x8xf32>
    %139 = tpu.matmul %136, %137, %cst_46 {dimension_numbers = #tpu.dot_dimension_numbers<[1], [1], [0], [0], [0, 0, 1, 0], [], []>} : vector<8x128xf32>, vector<8x128xf32>, vector<8x8xf32> -> vector<8x8xf32>
    %cst_47 = arith.constant dense<0xFF800000> : vector<8xf32>
    %140 = vector.multi_reduction <maximumf>, %139, %cst_47 [1] : vector<8x8xf32> to vector<8xf32>
    %141 = vector.shape_cast %140 : vector<8xf32> to vector<8x1xf32>
    %142 = vector.broadcast %141 : vector<8x1xf32> to vector<8x8xf32>
    %143 = arith.subf %139, %142 : vector<8x8xf32>
    %144 = math.exp %143 : vector<8x8xf32>
    %cst_48 = arith.constant dense<0.000000e+00> : vector<8xf32>
    %145 = vector.multi_reduction <add>, %144, %cst_48 [1] : vector<8x8xf32> to vector<8xf32>
    %146 = vector.shape_cast %145 : vector<8xf32> to vector<8x1xf32>
    %147 = tpu.reciprocal %146 {approx = true} : vector<8x1xf32> -> vector<8x1xf32>
    %148 = vector.broadcast %147 : vector<8x1xf32> to vector<8x8xf32>
    %149 = arith.mulf %144, %148 : vector<8x8xf32>
    %cst_49 = arith.constant dense<0.000000e+00> : vector<8x128xf32>
    %150 = tpu.matmul %149, %138, %cst_49 {dimension_numbers = #tpu.dot_dimension_numbers<[1], [0], [0], [1], [0, 0, 1, 1], [], []>} : vector<8x8xf32>, vector<8x128xf32>, vector<8x128xf32> -> vector<8x128xf32>
    %151 = vector.extract_strided_slice %2 {offsets = [384, 0], sizes = [128, 32], strides = [1, 1]} : vector<512x32xf32> to vector<128x32xf32>
    %cst_50 = arith.constant dense<0.000000e+00> : vector<8x32xf32>
    %152 = tpu.matmul %150, %151, %cst_50 {dimension_numbers = #tpu.dot_dimension_numbers<[1], [0], [0], [1], [0, 0, 1, 1], [], []>} : vector<8x128xf32>, vector<128x32xf32>, vector<8x32xf32> -> vector<8x32xf32>
    %153 = arith.addf %135, %152 : vector<8x32xf32>
    %154 = vector.broadcast %3 : vector<1x32xf32> to vector<8x32xf32>
    %155 = arith.addf %153, %154 : vector<8x32xf32>
    %c8 = arith.constant 8 : index
    %c0_51 = arith.constant 0 : index
    %156 = vector.load %arg5[%c8, %c0_51] : memref<16x32xf32, #tpu.memory_space<vmem>>, vector<8x32xf32>
    tpu.vector_store %arg5[%c8, %c0_51], %155 {strides = array<i32>} : memref<16x32xf32, #tpu.memory_space<vmem>>, vector<8x32xf32>,
    return
  }
  func.func @transform_0(%arg0: i32) -> (i32, i32) {
    %c0_i32 = arith.constant 0 : i32
    %c0_i32_0 = arith.constant 0 : i32
    %c0_i32_1 = arith.constant 0 : i32
    return %c0_i32, %c0_i32_0 : i32, i32
  }
  func.func @transform_1(%arg0: i32) -> (i32, i32) {
    %c0_i32 = arith.constant 0 : i32
    %c0_i32_0 = arith.constant 0 : i32
    %c0_i32_1 = arith.constant 0 : i32
    return %c0_i32, %c0_i32_0 : i32, i32
  }
  func.func @transform_2(%arg0: i32) -> (i32, i32) {
    %c0_i32 = arith.constant 0 : i32
    %c0_i32_0 = arith.constant 0 : i32
    %c0_i32_1 = arith.constant 0 : i32
    return %c0_i32, %c0_i32_0 : i32, i32
  }
  func.func @transform_3(%arg0: i32) -> (i32, i32) {
    %c0_i32 = arith.constant 0 : i32
    %c0_i32_0 = arith.constant 0 : i32
    %c0_i32_1 = arith.constant 0 : i32
    return %c0_i32, %c0_i32_0 : i32, i32
  }
  func.func @transform_4(%arg0: i32) -> (i32, i32) {
    %c0_i32 = arith.constant 0 : i32
    %c0_i32_0 = arith.constant 0 : i32
    %c0_i32_1 = arith.constant 0 : i32
    return %c0_i32, %c0_i32_0 : i32, i32
  }
}

</mosaic_0001>

<llo_original>
// kernel: tpu_custom_call.1
$region0: #{tpu_custom_call.1}
  #allocation0 [shape = 'u32[]', space=smem, size = 0x4, offset = 0x4, fixed_abs, tag = 'smem constant byte address 0x4 - core index']
  #allocation1 [shape = 'u32[144,128]{1,0:T(1,128)}', space=vmem, size = 0x12000, scoped, tag = 'internal scratch']
  %s0 = inlined_call_operand.vmem [shape: f32[16,32], index: 0, kind: input, shape index: {}]
  %s1 = inlined_call_operand.vmem [shape: f32[32,1536], index: 1, kind: input, shape index: {}]
  %s2 = inlined_call_operand.vmem [shape: f32[512,32], index: 2, kind: input, shape index: {}]
  %s3 = inlined_call_operand.vmem [shape: f32[1,32], index: 3, kind: input, shape index: {}]
  %s4 = inlined_call_operand.hbm [shape: f32[16,32], index: 4, kind: output, shape index: {}]
  %s5 = sld [smem:[#allocation0]]
  $region26: #{tpu_custom_call.1} parent=0
    _
  %s7 = ssub.s32 1, %s5
  %s8 = scalar_select 0, %s7, %s5
  $region1: #{tpu_custom_call.1} parent=0
    #allocation2 [shape = 'u8[8192]{0}', space=vmem, size = 0x2000, scoped, tag = 'output window, operand 0, single buffered']
    #allocation3 [shape = 's32[1]{0}', space=sflag, size = 0x4, scoped, tag = 'scoped memory for tpu_custom_call.1']
    %9 = vsyncpa [#allocation3], 0
    // Predicated region
    $region2: #{tpu_custom_call.1} parent=1 // pred_check
      _
    $region3: #{tpu_custom_call.1} parent=1 // pred_check_branch
      %11 = sbr.rel (0) target = $region5
    $region4: #{tpu_custom_call.1} parent=1 // pred_region
      _
    $region5: #{tpu_custom_call.1} parent=1 // pred_fallthru
      _
    // Predicated region
    $region6: #{tpu_custom_call.1} parent=1 // pred_check
      _
    $region7: #{tpu_custom_call.1} parent=1 // pred_check_branch
      %13 = sbr.rel (0) target = $region9
    $region8: #{tpu_custom_call.1} parent=1 // pred_region
      _
    $region9: #{tpu_custom_call.1} parent=1 // pred_fallthru
      _
    // Predicated region
    $region10: #{tpu_custom_call.1} parent=1 // pred_check
      _
    $region11: #{tpu_custom_call.1} parent=1 // pred_check_branch
      %15 = sbr.rel (0) target = $region13
    $region12: #{tpu_custom_call.1} parent=1 // pred_region
      _
    $region13: #{tpu_custom_call.1} parent=1 // pred_fallthru
      _
    // Predicated region
    $region14: #{tpu_custom_call.1} parent=1 // pred_check
      _
    $region15: #{tpu_custom_call.1} parent=1 // pred_check_branch
      %17 = sbr.rel (0) target = $region17
    $region16: #{tpu_custom_call.1} parent=1 // pred_region
      _
    $region17: #{tpu_custom_call.1} parent=1 // pred_fallthru
      _
    %v18 = vld [vmem:[%s0] sm:$0xff]
    %v19 = vld [vmem:[%s0 + $0x8] sm:$0xff]
    %v20 = vld [vmem:[%s1] sm:$0xff]
    %v21 = vld [vmem:[%s1 + $0x8] sm:$0xff]
    %v22 = vld [vmem:[%s1 + $0x10] sm:$0xff]
    %v23 = vld [vmem:[%s1 + $0x18] sm:$0xff]
    %v24 = vld [vmem:[%s1 + $0x20] sm:$0xff]
    %v25 = vld [vmem:[%s1 + $0x28] sm:$0xff]
    %v26 = vld [vmem:[%s1 + $0x30] sm:$0xff]
    %v27 = vld [vmem:[%s1 + $0x38] sm:$0xff]
    %v28 = vld [vmem:[%s1 + $0x40] sm:$0xff]
    %v29 = vld [vmem:[%s1 + $0x48] sm:$0xff]
    %v30 = vld [vmem:[%s1 + $0x50] sm:$0xff]
    %v31 = vld [vmem:[%s1 + $0x58] sm:$0xff]
    %v32 = vld [vmem:[%s1 + $0x60] sm:$0xff]
    %v33 = vld [vmem:[%s1 + $0x68] sm:$0xff]
    %v34 = vld [vmem:[%s1 + $0x70] sm:$0xff]
    %v35 = vld [vmem:[%s1 + $0x78] sm:$0xff]
    %v36 = vld [vmem:[%s1 + $0x80] sm:$0xff]
    %v37 = vld [vmem:[%s1 + $0x88] sm:$0xff]
    %v38 = vld [vmem:[%s1 + $0x90] sm:$0xff]
    %v39 = vld [vmem:[%s1 + $0x98] sm:$0xff]
    %v40 = vld [vmem:[%s1 + $0xa0] sm:$0xff]
    %v41 = vld [vmem:[%s1 + $0xa8] sm:$0xff]
    %v42 = vld [vmem:[%s1 + $0xb0] sm:$0xff]
    %v43 = vld [vmem:[%s1 + $0xb8] sm:$0xff]
    %v44 = vld [vmem:[%s1 + $0xc0] sm:$0xff]
    %v45 = vld [vmem:[%s1 + $0xc8] sm:$0xff]
    %v46 = vld [vmem:[%s1 + $0xd0] sm:$0xff]
    %v47 = vld [vmem:[%s1 + $0xd8] sm:$0xff]
    %v48 = vld [vmem:[%s1 + $0xe0] sm:$0xff]
    %v49 = vld [vmem:[%s1 + $0xe8] sm:$0xff]
    %v50 = vld [vmem:[%s1 + $0xf0] sm:$0xff]
    %v51 = vld [vmem:[%s1 + $0xf8] sm:$0xff]
    %v52 = vld [vmem:[%s1 + $0x100] sm:$0xff]
    %v53 = vld [vmem:[%s1 + $0x108] sm:$0xff]
    %v54 = vld [vmem:[%s1 + $0x110] sm:$0xff]
    %v55 = vld [vmem:[%s1 + $0x118] sm:$0xff]
    %v56 = vld [vmem:[%s1 + $0x120] sm:$0xff]
    %v57 = vld [vmem:[%s1 + $0x128] sm:$0xff]
    %v58 = vld [vmem:[%s1 + $0x130] sm:$0xff]
    %v59 = vld [vmem:[%s1 + $0x138] sm:$0xff]
    %v60 = vld [vmem:[%s1 + $0x140] sm:$0xff]
    %v61 = vld [vmem:[%s1 + $0x148] sm:$0xff]
    %v62 = vld [vmem:[%s1 + $0x150] sm:$0xff]
    %v63 = vld [vmem:[%s1 + $0x158] sm:$0xff]
    %v64 = vld [vmem:[%s1 + $0x160] sm:$0xff]
    %v65 = vld [vmem:[%s1 + $0x168] sm:$0xff]
    %v66 = vld [vmem:[%s1 + $0x170] sm:$0xff]
    %v67 = vld [vmem:[%s1 + $0x178] sm:$0xff]
    %v68 = vld [vmem:[%s2] sm:$0xff]
    %v69 = vld [vmem:[%s2 + $0x8] sm:$0xff]
    %v70 = vld [vmem:[%s2 + $0x10] sm:$0xff]
    %v71 = vld [vmem:[%s2 + $0x18] sm:$0xff]
    %v72 = vld [vmem:[%s2 + $0x20] sm:$0xff]
    %v73 = vld [vmem:[%s2 + $0x28] sm:$0xff]
    %v74 = vld [vmem:[%s2 + $0x30] sm:$0xff]
    %v75 = vld [vmem:[%s2 + $0x38] sm:$0xff]
    %v76 = vld [vmem:[%s2 + $0x40] sm:$0xff]
    %v77 = vld [vmem:[%s2 + $0x48] sm:$0xff]
    %v78 = vld [vmem:[%s2 + $0x50] sm:$0xff]
    %v79 = vld [vmem:[%s2 + $0x58] sm:$0xff]
    %v80 = vld [vmem:[%s2 + $0x60] sm:$0xff]
    %v81 = vld [vmem:[%s2 + $0x68] sm:$0xff]
    %v82 = vld [vmem:[%s2 + $0x70] sm:$0xff]
    %v83 = vld [vmem:[%s2 + $0x78] sm:$0xff]
    %v84 = vld [vmem:[%s2 + $0x80] sm:$0xff]
    %v85 = vld [vmem:[%s2 + $0x88] sm:$0xff]
    %v86 = vld [vmem:[%s2 + $0x90] sm:$0xff]
    %v87 = vld [vmem:[%s2 + $0x98] sm:$0xff]
    %v88 = vld [vmem:[%s2 + $0xa0] sm:$0xff]
    %v89 = vld [vmem:[%s2 + $0xa8] sm:$0xff]
    %v90 = vld [vmem:[%s2 + $0xb0] sm:$0xff]
    %v91 = vld [vmem:[%s2 + $0xb8] sm:$0xff]
    %v92 = vld [vmem:[%s2 + $0xc0] sm:$0xff]
    %v93 = vld [vmem:[%s2 + $0xc8] sm:$0xff]
    %v94 = vld [vmem:[%s2 + $0xd0] sm:$0xff]
    %v95 = vld [vmem:[%s2 + $0xd8] sm:$0xff]
    %v96 = vld [vmem:[%s2 + $0xe0] sm:$0xff]
    %v97 = vld [vmem:[%s2 + $0xe8] sm:$0xff]
    %v98 = vld [vmem:[%s2 + $0xf0] sm:$0xff]
    %v99 = vld [vmem:[%s2 + $0xf8] sm:$0xff]
    %v100 = vld [vmem:[%s2 + $0x100] sm:$0xff]
    %v101 = vld [vmem:[%s2 + $0x108] sm:$0xff]
    %v102 = vld [vmem:[%s2 + $0x110] sm:$0xff]
    %v103 = vld [vmem:[%s2 + $0x118] sm:$0xff]
    %v104 = vld [vmem:[%s2 + $0x120] sm:$0xff]
    %v105 = vld [vmem:[%s2 + $0x128] sm:$0xff]
    %v106 = vld [vmem:[%s2 + $0x130] sm:$0xff]
    %v107 = vld [vmem:[%s2 + $0x138] sm:$0xff]
    %v108 = vld [vmem:[%s2 + $0x140] sm:$0xff]
    %v109 = vld [vmem:[%s2 + $0x148] sm:$0xff]
    %v110 = vld [vmem:[%s2 + $0x150] sm:$0xff]
    %v111 = vld [vmem:[%s2 + $0x158] sm:$0xff]
    %v112 = vld [vmem:[%s2 + $0x160] sm:$0xff]
    %v113 = vld [vmem:[%s2 + $0x168] sm:$0xff]
    %v114 = vld [vmem:[%s2 + $0x170] sm:$0xff]
    %v115 = vld [vmem:[%s2 + $0x178] sm:$0xff]
    %v116 = vld [vmem:[%s2 + $0x180] sm:$0xff]
    %v117 = vld [vmem:[%s2 + $0x188] sm:$0xff]
    %v118 = vld [vmem:[%s2 + $0x190] sm:$0xff]
    %v119 = vld [vmem:[%s2 + $0x198] sm:$0xff]
    %v120 = vld [vmem:[%s2 + $0x1a0] sm:$0xff]
    %v121 = vld [vmem:[%s2 + $0x1a8] sm:$0xff]
    %v122 = vld [vmem:[%s2 + $0x1b0] sm:$0xff]
    %v123 = vld [vmem:[%s2 + $0x1b8] sm:$0xff]
    %v124 = vld [vmem:[%s2 + $0x1c0] sm:$0xff]
    %v125 = vld [vmem:[%s2 + $0x1c8] sm:$0xff]
    %v126 = vld [vmem:[%s2 + $0x1d0] sm:$0xff]
    %v127 = vld [vmem:[%s2 + $0x1d8] sm:$0xff]
    %v128 = vld [vmem:[%s2 + $0x1e0] sm:$0xff]
    %v129 = vld [vmem:[%s2 + $0x1e8] sm:$0xff]
    %v130 = vld [vmem:[%s2 + $0x1f0] sm:$0xff]
    %v131 = vld [vmem:[%s2 + $0x1f8] sm:$0xff]
    %v132 = vld [vmem:[%s3] sm:$0x1]
    %vm133 = vcmask 261120
    %v135 = vsel %vm133, %v18, 0
    %v138 = vsel %vm133, %v19, 0
    %140 = vmatprep.subr.mxu0 %v21
    %141 = vmatpush1.msra.mxu0 %v20
    %142 = vmatprep.subr.mxu0 %v33
    %143 = vmatpush1.msra.mxu0 %v32
    %144 = vmatprep.subr.mxu0 %v45
    %145 = vmatpush1.msra.mxu0 %v44
    %146 = vmatprep.subr.mxu0 %v57
    %147 = vmatpush1.msra.mxu0 %v56
    %148 = vmatprep.subr.mxu0 0.0
    %149 = vmatpush1.msra.mxu0 0.0
    %150 = vmatprep.subr.mxu0 0.0
    %151 = vmatpush1.msra.mxu0 0.0
    %152 = vmatprep.subr.mxu0 0.0
    %153 = vmatpush1.msra.mxu0 0.0
    %154 = vmatprep.subr.mxu0 0.0
    %155 = vmatpush1.msra.mxu0 0.0
    %156 = vmatprep.subr.mxu0 0.0
    %157 = vmatpush1.msra.mxu0 0.0
    %158 = vmatprep.subr.mxu0 0.0
    %159 = vmatpush1.msra.mxu0 0.0
    %160 = vmatprep.subr.mxu0 0.0
    %161 = vmatpush1.msra.mxu0 0.0
    %162 = vmatprep.subr.mxu0 0.0
    %163 = vmatpush1.msra.mxu0 0.0
    %164 = vmatprep.subr.mxu0 0.0
    %165 = vmatpush1.msra.mxu0 0.0
    %166 = vmatprep.subr.mxu0 0.0
    %167 = vmatpush1.msra.mxu0 0.0
    %168 = vmatprep.subr.mxu0 0.0
    %169 = vmatpush1.msra.mxu0 0.0
    %170 = vmatprep.subr.mxu0 0.0
    %171 = vmatpush1.msra.mxu0 0.0
    %172 = vmatprep.subr.mxu0 0.0
    %173 = vmatpush1.msra.mxu0 0.0
    %174 = vmatprep.subr.mxu0 0.0
    %175 = vmatpush1.msra.mxu0 0.0
    %176 = vmatprep.subr.mxu0 0.0
    %177 = vmatpush1.msra.mxu0 0.0
    %178 = vmatprep.subr.mxu0 0.0
    %179 = vmatpush1.msra.mxu0 0.0
    %180 = vmatprep.subr.mxu0 0.0
    %181 = vmatpush1.msra.mxu0 0.0
    %182 = vmatprep.subr.mxu0 0.0
    %183 = vmatpush1.msra.mxu0 0.0
    %184 = vmatprep.subr.mxu0 0.0
    %185 = vmatpush1.msra.mxu0 0.0
    %186 = vmatprep.subr.mxu0 0.0
    %187 = vmatpush1.msra.mxu0 0.0
    %188 = vmatprep.subr.mxu0 0.0
    %189 = vmatpush1.msra.mxu0 0.0
    %190 = vmatprep.subr.mxu0 0.0
    %191 = vmatpush1.msra.mxu0 0.0
    %192 = vmatprep.subr.mxu0 0.0
    %193 = vmatpush1.msra.mxu0 0.0
    %194 = vmatprep.subr.mxu0 0.0
    %195 = vmatpush1.msra.mxu0 0.0
    %196 = vmatprep.subr.mxu0 0.0
    %197 = vmatpush1.msra.mxu0 0.0
    %198 = vmatprep.subr.mxu0 0.0
    %199 = vmatpush1.msra.mxu0 0.0
    %200 = vmatprep.subr.mxu0 0.0
    %201 = vmatpush1.msra.mxu0 0.0
    %202 = vmatprep.subr.mxu0 0.0
    %203 = vmatpush1.msra.mxu0 0.0
    %204 = vmatprep.mubr.f32.mxu0 0.0
    %205 = vmatmul.mubr.f32.gmra.mrb[0].mxu0 %v135
    %v206 = vpop.f32.mrb[0].mxu0
    %v207 = vadd.f32 0.0, %v206
    %v208 = vpop.f32.mrb[0].mxu0
    %v209 = vadd.f32 0.0, %v208
    %210 = vmatprep.mubr.f32.mxu0 0.0
    %211 = vmatmul.mubr.f32.gmra.mrb[0].mxu0 %v138
    %v212 = vpop.f32.mrb[0].mxu0
    %v213 = vadd.f32 0.0, %v212
    %v214 = vpop.f32.mrb[0].mxu0
    %v215 = vadd.f32 0.0, %v214
    %216 = vdwg.mxu0
    %217 = vmatprep.subr.mxu0 %v23
    %218 = vmatpush1.msra.mxu0 %v22
    %219 = vmatprep.subr.mxu0 %v35
    %220 = vmatpush1.msra.mxu0 %v34
    %221 = vmatprep.subr.mxu0 %v47
    %222 = vmatpush1.msra.mxu0 %v46
    %223 = vmatprep.subr.mxu0 %v59
    %224 = vmatpush1.msra.mxu0 %v58
    %225 = vmatprep.subr.mxu0 0.0
    %226 = vmatpush1.msra.mxu0 0.0
    %227 = vmatprep.subr.mxu0 0.0
    %228 = vmatpush1.msra.mxu0 0.0
    %229 = vmatprep.subr.mxu0 0.0
    %230 = vmatpush1.msra.mxu0 0.0
    %231 = vmatprep.subr.mxu0 0.0
    %232 = vmatpush1.msra.mxu0 0.0
    %233 = vmatprep.subr.mxu0 0.0
    %234 = vmatpush1.msra.mxu0 0.0
    %235 = vmatprep.subr.mxu0 0.0
    %236 = vmatpush1.msra.mxu0 0.0
    %237 = vmatprep.subr.mxu0 0.0
    %238 = vmatpush1.msra.mxu0 0.0
    %239 = vmatprep.subr.mxu0 0.0
    %240 = vmatpush1.msra.mxu0 0.0
    %241 = vmatprep.subr.mxu0 0.0
    %242 = vmatpush1.msra.mxu0 0.0
    %243 = vmatprep.subr.mxu0 0.0
    %244 = vmatpush1.msra.mxu0 0.0
    %245 = vmatprep.subr.mxu0 0.0
    %246 = vmatpush1.msra.mxu0 0.0
    %247 = vmatprep.subr.mxu0 0.0
    %248 = vmatpush1.msra.mxu0 0.0
    %249 = vmatprep.subr.mxu0 0.0
    %250 = vmatpush1.msra.mxu0 0.0
    %251 = vmatprep.subr.mxu0 0.0
    %252 = vmatpush1.msra.mxu0 0.0
    %253 = vmatprep.subr.mxu0 0.0
    %254 = vmatpush1.msra.mxu0 0.0
    %255 = vmatprep.subr.mxu0 0.0
    %256 = vmatpush1.msra.mxu0 0.0
    %257 = vmatprep.subr.mxu0 0.0
    %258 = vmatpush1.msra.mxu0 0.0
    %259 = vmatprep.subr.mxu0 0.0
    %260 = vmatpush1.msra.mxu0 0.0
    %261 = vmatprep.subr.mxu0 0.0
    %262 = vmatpush1.msra.mxu0 0.0
    %263 = vmatprep.subr.mxu0 0.0
    %264 = vmatpush1.msra.mxu0 0.0
    %265 = vmatprep.subr.mxu0 0.0
    %266 = vmatpush1.msra.mxu0 0.0
    %267 = vmatprep.subr.mxu0 0.0
    %268 = vmatpush1.msra.mxu0 0.0
    %269 = vmatprep.subr.mxu0 0.0
    %270 = vmatpush1.msra.mxu0 0.0
    %271 = vmatprep.subr.mxu0 0.0
    %272 = vmatpush1.msra.mxu0 0.0
    %273 = vmatprep.subr.mxu0 0.0
    %274 = vmatpush1.msra.mxu0 0.0
    %275 = vmatprep.subr.mxu0 0.0
    %276 = vmatpush1.msra.mxu0 0.0
    %277 = vmatprep.subr.mxu0 0.0
    %278 = vmatpush1.msra.mxu0 0.0
    %279 = vmatprep.subr.mxu0 0.0
    %280 = vmatpush1.msra.mxu0 0.0
    %281 = vmatprep.mubr.f32.mxu0 0.0
    %282 = vmatmul.mubr.f32.gmra.mrb[0].mxu0 %v135
    %v283 = vpop.f32.mrb[0].mxu0
    %v284 = vadd.f32 0.0, %v283
    %v285 = vpop.f32.mrb[0].mxu0
    %v286 = vadd.f32 0.0, %v285
    %287 = vmatprep.mubr.f32.mxu0 0.0
    %288 = vmatmul.mubr.f32.gmra.mrb[0].mxu0 %v138
    %v289 = vpop.f32.mrb[0].mxu0
    %v290 = vadd.f32 0.0, %v289
    %v291 = vpop.f32.mrb[0].mxu0
    %v292 = vadd.f32 0.0, %v291
    %293 = vdwg.mxu0
    %294 = vmatprep.subr.mxu0 %v25
    %295 = vmatpush1.msra.mxu0 %v24
    %296 = vmatprep.subr.mxu0 %v37
    %297 = vmatpush1.msra.mxu0 %v36
    %298 = vmatprep.subr.mxu0 %v49
    %299 = vmatpush1.msra.mxu0 %v48
    %300 = vmatprep.subr.mxu0 %v61
    %301 = vmatpush1.msra.mxu0 %v60
    %302 = vmatprep.subr.mxu0 0.0
    %303 = vmatpush1.msra.mxu0 0.0
    %304 = vmatprep.subr.mxu0 0.0
    %305 = vmatpush1.msra.mxu0 0.0
    %306 = vmatprep.subr.mxu0 0.0
    %307 = vmatpush1.msra.mxu0 0.0
    %308 = vmatprep.subr.mxu0 0.0
    %309 = vmatpush1.msra.mxu0 0.0
    %310 = vmatprep.subr.mxu0 0.0
    %311 = vmatpush1.msra.mxu0 0.0
    %312 = vmatprep.subr.mxu0 0.0
    %313 = vmatpush1.msra.mxu0 0.0
    %314 = vmatprep.subr.mxu0 0.0
    %315 = vmatpush1.msra.mxu0 0.0
    %316 = vmatprep.subr.mxu0 0.0
    %317 = vmatpush1.msra.mxu0 0.0
    %318 = vmatprep.subr.mxu0 0.0
    %319 = vmatpush1.msra.mxu0 0.0
    %320 = vmatprep.subr.mxu0 0.0
    %321 = vmatpush1.msra.mxu0 0.0
    %322 = vmatprep.subr.mxu0 0.0
    %323 = vmatpush1.msra.mxu0 0.0
    %324 = vmatprep.subr.mxu0 0.0
    %325 = vmatpush1.msra.mxu0 0.0
    %326 = vmatprep.subr.mxu0 0.0
    %327 = vmatpush1.msra.mxu0 0.0
    %328 = vmatprep.subr.mxu0 0.0
    %329 = vmatpush1.msra.mxu0 0.0
    %330 = vmatprep.subr.mxu0 0.0
    %331 = vmatpush1.msra.mxu0 0.0
    %332 = vmatprep.subr.mxu0 0.0
    %333 = vmatpush1.msra.mxu0 0.0
    %334 = vmatprep.subr.mxu0 0.0
    %335 = vmatpush1.msra.mxu0 0.0
    %336 = vmatprep.subr.mxu0 0.0
    %337 = vmatpush1.msra.mxu0 0.0
    %338 = vmatprep.subr.mxu0 0.0
    %339 = vmatpush1.msra.mxu0 0.0
    %340 = vmatprep.subr.mxu0 0.0
    %341 = vmatpush1.msra.mxu0 0.0
    %342 = vmatprep.subr.mxu0 0.0
    %343 = vmatpush1.msra.mxu0 0.0
    %344 = vmatprep.subr.mxu0 0.0
    %345 = vmatpush1.msra.mxu0 0.0
    %346 = vmatprep.subr.mxu0 0.0
    %347 = vmatpush1.msra.mxu0 0.0
    %348 = vmatprep.subr.mxu0 0.0
    %349 = vmatpush1.msra.mxu0 0.0
    %350 = vmatprep.subr.mxu0 0.0
    %351 = vmatpush1.msra.mxu0 0.0
    %352 = vmatprep.subr.mxu0 0.0
    %353 = vmatpush1.msra.mxu0 0.0
    %354 = vmatprep.subr.mxu0 0.0
    %355 = vmatpush1.msra.mxu0 0.0
    %356 = vmatprep.subr.mxu0 0.0
    %357 = vmatpush1.msra.mxu0 0.0
    %358 = vmatprep.mubr.f32.mxu0 0.0
    %359 = vmatmul.mubr.f32.gmra.mrb[0].mxu0 %v135
    %v360 = vpop.f32.mrb[0].mxu0
    %v361 = vadd.f32 0.0, %v360
    %v362 = vpop.f32.mrb[0].mxu0
    %v363 = vadd.f32 0.0, %v362
    %364 = vmatprep.mubr.f32.mxu0 0.0
    %365 = vmatmul.mubr.f32.gmra.mrb[0].mxu0 %v138
    %v366 = vpop.f32.mrb[0].mxu0
    %v367 = vadd.f32 0.0, %v366
    %v368 = vpop.f32.mrb[0].mxu0
    %v369 = vadd.f32 0.0, %v368
    %370 = vdwg.mxu0
    %371 = vmatprep.subr.mxu0 %v27
    %372 = vmatpush1.msra.mxu0 %v26
    %373 = vmatprep.subr.mxu0 %v39
    %374 = vmatpush1.msra.mxu0 %v38
    %375 = vmatprep.subr.mxu0 %v51
    %376 = vmatpush1.msra.mxu0 %v50
    %377 = vmatprep.subr.mxu0 %v63
    %378 = vmatpush1.msra.mxu0 %v62
    %379 = vmatprep.subr.mxu0 0.0
    %380 = vmatpush1.msra.mxu0 0.0
    %381 = vmatprep.subr.mxu0 0.0
    %382 = vmatpush1.msra.mxu0 0.0
    %383 = vmatprep.subr.mxu0 0.0
    %384 = vmatpush1.msra.mxu0 0.0
    %385 = vmatprep.subr.mxu0 0.0
    %386 = vmatpush1.msra.mxu0 0.0
    %387 = vmatprep.subr.mxu0 0.0
    %388 = vmatpush1.msra.mxu0 0.0
    %389 = vmatprep.subr.mxu0 0.0
    %390 = vmatpush1.msra.mxu0 0.0
    %391 = vmatprep.subr.mxu0 0.0
    %392 = vmatpush1.msra.mxu0 0.0
    %393 = vmatprep.subr.mxu0 0.0
    %394 = vmatpush1.msra.mxu0 0.0
    %395 = vmatprep.subr.mxu0 0.0
    %396 = vmatpush1.msra.mxu0 0.0
    %397 = vmatprep.subr.mxu0 0.0
    %398 = vmatpush1.msra.mxu0 0.0
    %399 = vmatprep.subr.mxu0 0.0
    %400 = vmatpush1.msra.mxu0 0.0
    %401 = vmatprep.subr.mxu0 0.0
    %402 = vmatpush1.msra.mxu0 0.0
    %403 = vmatprep.subr.mxu0 0.0
    %404 = vmatpush1.msra.mxu0 0.0
    %405 = vmatprep.subr.mxu0 0.0
    %406 = vmatpush1.msra.mxu0 0.0
    %407 = vmatprep.subr.mxu0 0.0
    %408 = vmatpush1.msra.mxu0 0.0
    %409 = vmatprep.subr.mxu0 0.0
    %410 = vmatpush1.msra.mxu0 0.0
    %411 = vmatprep.subr.mxu0 0.0
    %412 = vmatpush1.msra.mxu0 0.0
    %413 = vmatprep.subr.mxu0 0.0
    %414 = vmatpush1.msra.mxu0 0.0
    %415 = vmatprep.subr.mxu0 0.0
    %416 = vmatpush1.msra.mxu0 0.0
    %417 = vmatprep.subr.mxu0 0.0
    %418 = vmatpush1.msra.mxu0 0.0
    %419 = vmatprep.subr.mxu0 0.0
    %420 = vmatpush1.msra.mxu0 0.0
    %421 = vmatprep.subr.mxu0 0.0
    %422 = vmatpush1.msra.mxu0 0.0
    %423 = vmatprep.subr.mxu0 0.0
    %424 = vmatpush1.msra.mxu0 0.0
    %425 = vmatprep.subr.mxu0 0.0
    %426 = vmatpush1.msra.mxu0 0.0
    %427 = vmatprep.subr.mxu0 0.0
    %428 = vmatpush1.msra.mxu0 0.0
    %429 = vmatprep.subr.mxu0 0.0
    %430 = vmatpush1.msra.mxu0 0.0
    %431 = vmatprep.subr.mxu0 0.0
    %432 = vmatpush1.msra.mxu0 0.0
    %433 = vmatprep.subr.mxu0 0.0
    %434 = vmatpush1.msra.mxu0 0.0
    %435 = vmatprep.mubr.f32.mxu0 0.0
    %436 = vmatmul.mubr.f32.gmra.mrb[0].mxu0 %v135
    %v437 = vpop.f32.mrb[0].mxu0
    %v438 = vadd.f32 0.0, %v437
    %v439 = vpop.f32.mrb[0].mxu0
    %v440 = vadd.f32 0.0, %v439
    %441 = vmatprep.mubr.f32.mxu0 0.0
    %442 = vmatmul.mubr.f32.gmra.mrb[0].mxu0 %v138
    %v443 = vpop.f32.mrb[0].mxu0
    %v444 = vadd.f32 0.0, %v443
    %v445 = vpop.f32.mrb[0].mxu0
    %v446 = vadd.f32 0.0, %v445
    %447 = vdwg.mxu0
    %448 = vmatprep.subr.mxu0 %v29
    %449 = vmatpush1.msra.mxu0 %v28
    %450 = vmatprep.subr.mxu0 %v41
    %451 = vmatpush1.msra.mxu0 %v40
    %452 = vmatprep.subr.mxu0 %v53
    %453 = vmatpush1.msra.mxu0 %v52
    %454 = vmatprep.subr.mxu0 %v65
    %455 = vmatpush1.msra.mxu0 %v64
    %456 = vmatprep.subr.mxu0 0.0
    %457 = vmatpush1.msra.mxu0 0.0
    %458 = vmatprep.subr.mxu0 0.0
    %459 = vmatpush1.msra.mxu0 0.0
    %460 = vmatprep.subr.mxu0 0.0
    %461 = vmatpush1.msra.mxu0 0.0
    %462 = vmatprep.subr.mxu0 0.0
    %463 = vmatpush1.msra.mxu0 0.0
    %464 = vmatprep.subr.mxu0 0.0
    %465 = vmatpush1.msra.mxu0 0.0
    %466 = vmatprep.subr.mxu0 0.0
    %467 = vmatpush1.msra.mxu0 0.0
    %468 = vmatprep.subr.mxu0 0.0
    %469 = vmatpush1.msra.mxu0 0.0
    %470 = vmatprep.subr.mxu0 0.0
    %471 = vmatpush1.msra.mxu0 0.0
    %472 = vmatprep.subr.mxu0 0.0
    %473 = vmatpush1.msra.mxu0 0.0
    %474 = vmatprep.subr.mxu0 0.0
    %475 = vmatpush1.msra.mxu0 0.0
    %476 = vmatprep.subr.mxu0 0.0
    %477 = vmatpush1.msra.mxu0 0.0
    %478 = vmatprep.subr.mxu0 0.0
    %479 = vmatpush1.msra.mxu0 0.0
    %480 = vmatprep.subr.mxu0 0.0
    %481 = vmatpush1.msra.mxu0 0.0
    %482 = vmatprep.subr.mxu0 0.0
    %483 = vmatpush1.msra.mxu0 0.0
    %484 = vmatprep.subr.mxu0 0.0
    %485 = vmatpush1.msra.mxu0 0.0
    %486 = vmatprep.subr.mxu0 0.0
    %487 = vmatpush1.msra.mxu0 0.0
    %488 = vmatprep.subr.mxu0 0.0
    %489 = vmatpush1.msra.mxu0 0.0
    %490 = vmatprep.subr.mxu0 0.0
    %491 = vmatpush1.msra.mxu0 0.0
    %492 = vmatprep.subr.mxu0 0.0
    %493 = vmatpush1.msra.mxu0 0.0
    %494 = vmatprep.subr.mxu0 0.0
    %495 = vmatpush1.msra.mxu0 0.0
    %496 = vmatprep.subr.mxu0 0.0
    %497 = vmatpush1.msra.mxu0 0.0
    %498 = vmatprep.subr.mxu0 0.0
    %499 = vmatpush1.msra.mxu0 0.0
    %500 = vmatprep.subr.mxu0 0.0
    %501 = vmatpush1.msra.mxu0 0.0
    %502 = vmatprep.subr.mxu0 0.0
    %503 = vmatpush1.msra.mxu0 0.0
    %504 = vmatprep.subr.mxu0 0.0
    %505 = vmatpush1.msra.mxu0 0.0
    %506 = vmatprep.subr.mxu0 0.0
    %507 = vmatpush1.msra.mxu0 0.0
    %508 = vmatprep.subr.mxu0 0.0
    %509 = vmatpush1.msra.mxu0 0.0
    %510 = vmatprep.subr.mxu0 0.0
    %511 = vmatpush1.msra.mxu0 0.0
    %512 = vmatprep.mubr.f32.mxu0 0.0
    %513 = vmatmul.mubr.f32.gmra.mrb[0].mxu0 %v135
    %v514 = vpop.f32.mrb[0].mxu0
    %v515 = vadd.f32 0.0, %v514
    %v516 = vpop.f32.mrb[0].mxu0
    %v517 = vadd.f32 0.0, %v516
    %518 = vmatprep.mubr.f32.mxu0 0.0
    %519 = vmatmul.mubr.f32.gmra.mrb[0].mxu0 %v138
    %v520 = vpop.f32.mrb[0].mxu0
    %v521 = vadd.f32 0.0, %v520
    %v522 = vpop.f32.mrb[0].mxu0
    %v523 = vadd.f32 0.0, %v522
    %524 = vdwg.mxu0
    %525 = vmatprep.subr.mxu0 %v31
    %526 = vmatpush1.msra.mxu0 %v30
    %527 = vmatprep.subr.mxu0 %v43
    %528 = vmatpush1.msra.mxu0 %v42
    %529 = vmatprep.subr.mxu0 %v55
    %530 = vmatpush1.msra.mxu0 %v54
    %531 = vmatprep.subr.mxu0 %v67
    %532 = vmatpush1.msra.mxu0 %v66
    %533 = vmatprep.subr.mxu0 0.0
    %534 = vmatpush1.msra.mxu0 0.0
    %535 = vmatprep.subr.mxu0 0.0
    %536 = vmatpush1.msra.mxu0 0.0
    %537 = vmatprep.subr.mxu0 0.0
    %538 = vmatpush1.msra.mxu0 0.0
    %539 = vmatprep.subr.mxu0 0.0
    %540 = vmatpush1.msra.mxu0 0.0
    %541 = vmatprep.subr.mxu0 0.0
    %542 = vmatpush1.msra.mxu0 0.0
    %543 = vmatprep.subr.mxu0 0.0
    %544 = vmatpush1.msra.mxu0 0.0
    %545 = vmatprep.subr.mxu0 0.0
    %546 = vmatpush1.msra.mxu0 0.0
    %547 = vmatprep.subr.mxu0 0.0
    %548 = vmatpush1.msra.mxu0 0.0
    %549 = vmatprep.subr.mxu0 0.0
    %550 = vmatpush1.msra.mxu0 0.0
    %551 = vmatprep.subr.mxu0 0.0
    %552 = vmatpush1.msra.mxu0 0.0
    %553 = vmatprep.subr.mxu0 0.0
    %554 = vmatpush1.msra.mxu0 0.0
    %555 = vmatprep.subr.mxu0 0.0
    %556 = vmatpush1.msra.mxu0 0.0
    %557 = vmatprep.subr.mxu0 0.0
    %558 = vmatpush1.msra.mxu0 0.0
    %559 = vmatprep.subr.mxu0 0.0
    %560 = vmatpush1.msra.mxu0 0.0
    %561 = vmatprep.subr.mxu0 0.0
    %562 = vmatpush1.msra.mxu0 0.0
    %563 = vmatprep.subr.mxu0 0.0
    %564 = vmatpush1.msra.mxu0 0.0
    %565 = vmatprep.subr.mxu0 0.0
    %566 = vmatpush1.msra.mxu0 0.0
    %567 = vmatprep.subr.mxu0 0.0
    %568 = vmatpush1.msra.mxu0 0.0
    %569 = vmatprep.subr.mxu0 0.0
    %570 = vmatpush1.msra.mxu0 0.0
    %571 = vmatprep.subr.mxu0 0.0
    %572 = vmatpush1.msra.mxu0 0.0
    %573 = vmatprep.subr.mxu0 0.0
    %574 = vmatpush1.msra.mxu0 0.0
    %575 = vmatprep.subr.mxu0 0.0
    %576 = vmatpush1.msra.mxu0 0.0
    %577 = vmatprep.subr.mxu0 0.0
    %578 = vmatpush1.msra.mxu0 0.0
    %579 = vmatprep.subr.mxu0 0.0
    %580 = vmatpush1.msra.mxu0 0.0
    %581 = vmatprep.subr.mxu0 0.0
    %582 = vmatpush1.msra.mxu0 0.0
    %583 = vmatprep.subr.mxu0 0.0
    %584 = vmatpush1.msra.mxu0 0.0
    %585 = vmatprep.subr.mxu0 0.0
    %586 = vmatpush1.msra.mxu0 0.0
    %587 = vmatprep.subr.mxu0 0.0
    %588 = vmatpush1.msra.mxu0 0.0
    %589 = vmatprep.mubr.f32.mxu0 0.0
    %590 = vmatmul.mubr.f32.gmra.mrb[0].mxu0 %v135
    %v591 = vpop.f32.mrb[0].mxu0
    %v592 = vadd.f32 0.0, %v591
    %v593 = vpop.f32.mrb[0].mxu0
    %v594 = vadd.f32 0.0, %v593
    %595 = vmatprep.mubr.f32.mxu0 0.0
    %596 = vmatmul.mubr.f32.gmra.mrb[0].mxu0 %v138
    %v597 = vpop.f32.mrb[0].mxu0
    %v598 = vadd.f32 0.0, %v597
    %v599 = vpop.f32.mrb[0].mxu0
    %v600 = vadd.f32 0.0, %v599
    %601 = vdwg.mxu0
    %602 = vmatprep.subr.mxu0 0.0
    %603 = vmatpush1.xpose.msra.mxu0 %v361
    %604 = vmatprep.subr.mxu0 0.0
    %605 = vmatpush1.xpose.msra.mxu0 0.0
    %606 = vmatprep.subr.mxu0 0.0
    %607 = vmatpush1.xpose.msra.mxu0 0.0
    %608 = vmatprep.subr.mxu0 0.0
    %609 = vmatpush1.xpose.msra.mxu0 0.0
    %610 = vmatprep.subr.mxu0 0.0
    %611 = vmatpush1.xpose.msra.mxu0 0.0
    %612 = vmatprep.subr.mxu0 0.0
    %613 = vmatpush1.xpose.msra.mxu0 0.0
    %614 = vmatprep.subr.mxu0 0.0
    %615 = vmatpush1.xpose.msra.mxu0 0.0
    %616 = vmatprep.subr.mxu0 0.0
    %617 = vmatpush1.xpose.msra.mxu0 0.0
    %618 = vmatprep.subr.mxu0 0.0
    %619 = vmatpush1.xpose.msra.mxu0 0.0
    %620 = vmatprep.subr.mxu0 0.0
    %621 = vmatpush1.xpose.msra.mxu0 0.0
    %622 = vmatprep.subr.mxu0 0.0
    %623 = vmatpush1.xpose.msra.mxu0 0.0
    %624 = vmatprep.subr.mxu0 0.0
    %625 = vmatpush1.xpose.msra.mxu0 0.0
    %626 = vmatprep.subr.mxu0 0.0
    %627 = vmatpush1.xpose.msra.mxu0 0.0
    %628 = vmatprep.subr.mxu0 0.0
    %629 = vmatpush1.xpose.msra.mxu0 0.0
    %630 = vmatprep.subr.mxu0 0.0
    %631 = vmatpush1.xpose.msra.mxu0 0.0
    %632 = vmatprep.subr.mxu0 0.0
    %633 = vmatpush1.xpose.msra.mxu0 0.0
    %634 = vmatprep.subr.mxu0 0.0
    %635 = vmatpush1.xpose.msra.mxu0 0.0
    %636 = vmatprep.subr.mxu0 0.0
    %637 = vmatpush1.xpose.msra.mxu0 0.0
    %638 = vmatprep.subr.mxu0 0.0
    %639 = vmatpush1.xpose.msra.mxu0 0.0
    %640 = vmatprep.subr.mxu0 0.0
    %641 = vmatpush1.xpose.msra.mxu0 0.0
    %642 = vmatprep.subr.mxu0 0.0
    %643 = vmatpush1.xpose.msra.mxu0 0.0
    %644 = vmatprep.subr.mxu0 0.0
    %645 = vmatpush1.xpose.msra.mxu0 0.0
    %646 = vmatprep.subr.mxu0 0.0
    %647 = vmatpush1.xpose.msra.mxu0 0.0
    %648 = vmatprep.subr.mxu0 0.0
    %649 = vmatpush1.xpose.msra.mxu0 0.0
    %650 = vmatprep.subr.mxu0 0.0
    %651 = vmatpush1.xpose.msra.mxu0 0.0
    %652 = vmatprep.subr.mxu0 0.0
    %653 = vmatpush1.xpose.msra.mxu0 0.0
    %654 = vmatprep.subr.mxu0 0.0
    %655 = vmatpush1.xpose.msra.mxu0 0.0
    %656 = vmatprep.subr.mxu0 0.0
    %657 = vmatpush1.xpose.msra.mxu0 0.0
    %658 = vmatprep.subr.mxu0 0.0
    %659 = vmatpush1.xpose.msra.mxu0 0.0
    %660 = vmatprep.subr.mxu0 0.0
    %661 = vmatpush1.xpose.msra.mxu0 0.0
    %662 = vmatprep.subr.mxu0 0.0
    %663 = vmatpush1.xpose.msra.mxu0 0.0
    %664 = vmatprep.subr.mxu0 0.0
    %665 = vmatpush1.xpose.msra.mxu0 0.0
    %666 = vmatprep.mubr.f32.mxu0 0.0
    %667 = vmatmul.mubr.f32.gmra.mrb[0].mxu0 %v207
    %v668 = vpop.f32.mrb[0].mxu0
    %v669 = vadd.f32 0.0, %v668
    %v670 = vpop.f32.mrb[0].mxu0
    %671 = vdwg.mxu0
    %vm672 = vcmask 64512
    %v673 = vsel %vm672, %v669, -inf
    %674 = vmax.xlane.f32.xlu0 %v673
    %v675 = vpop.xlane.xlu0 %674
    %v676 = vsub.f32 %v669, %v675
    %v677 = vmul.f32 %v676, 1.442695
    %v678 = vpow.pop %v677
    %v679 = vsel %vm672, %v678, 0.0
    %680 = vadd.xlane.f32.xlu0 %v679
    %v681 = vpop.xlane.xlu0 %680
    %v682 = vrcp.pop %v681
    %v683 = vmul.f32 %v678, %v682
    %v685 = vsel %vm672, %v683, 0
    %687 = vmatprep.subr.mxu0 0.0
    %688 = vmatpush1.msra.mxu0 %v515
    %689 = vmatprep.subr.mxu0 0.0
    %690 = vmatpush1.msra.mxu0 0.0
    %691 = vmatprep.subr.mxu0 0.0
    %692 = vmatpush1.msra.mxu0 0.0
    %693 = vmatprep.subr.mxu0 0.0
    %694 = vmatpush1.msra.mxu0 0.0
    %695 = vmatprep.subr.mxu0 0.0
    %696 = vmatpush1.msra.mxu0 0.0
    %697 = vmatprep.subr.mxu0 0.0
    %698 = vmatpush1.msra.mxu0 0.0
    %699 = vmatprep.subr.mxu0 0.0
    %700 = vmatpush1.msra.mxu0 0.0
    %701 = vmatprep.subr.mxu0 0.0
    %702 = vmatpush1.msra.mxu0 0.0
    %703 = vmatprep.subr.mxu0 0.0
    %704 = vmatpush1.msra.mxu0 0.0
    %705 = vmatprep.subr.mxu0 0.0
    %706 = vmatpush1.msra.mxu0 0.0
    %707 = vmatprep.subr.mxu0 0.0
    %708 = vmatpush1.msra.mxu0 0.0
    %709 = vmatprep.subr.mxu0 0.0
    %710 = vmatpush1.msra.mxu0 0.0
    %711 = vmatprep.subr.mxu0 0.0
    %712 = vmatpush1.msra.mxu0 0.0
    %713 = vmatprep.subr.mxu0 0.0
    %714 = vmatpush1.msra.mxu0 0.0
    %715 = vmatprep.subr.mxu0 0.0
    %716 = vmatpush1.msra.mxu0 0.0
    %717 = vmatprep.subr.mxu0 0.0
    %718 = vmatpush1.msra.mxu0 0.0
    %719 = vmatprep.subr.mxu0 0.0
    %720 = vmatpush1.msra.mxu0 0.0
    %721 = vmatprep.subr.mxu0 0.0
    %722 = vmatpush1.msra.mxu0 0.0
    %723 = vmatprep.subr.mxu0 0.0
    %724 = vmatpush1.msra.mxu0 0.0
    %725 = vmatprep.subr.mxu0 0.0
    %726 = vmatpush1.msra.mxu0 0.0
    %727 = vmatprep.subr.mxu0 0.0
    %728 = vmatpush1.msra.mxu0 0.0
    %729 = vmatprep.subr.mxu0 0.0
    %730 = vmatpush1.msra.mxu0 0.0
    %731 = vmatprep.subr.mxu0 0.0
    %732 = vmatpush1.msra.mxu0 0.0
    %733 = vmatprep.subr.mxu0 0.0
    %734 = vmatpush1.msra.mxu0 0.0
    %735 = vmatprep.subr.mxu0 0.0
    %736 = vmatpush1.msra.mxu0 0.0
    %737 = vmatprep.subr.mxu0 0.0
    %738 = vmatpush1.msra.mxu0 0.0
    %739 = vmatprep.subr.mxu0 0.0
    %740 = vmatpush1.msra.mxu0 0.0
    %741 = vmatprep.subr.mxu0 0.0
    %742 = vmatpush1.msra.mxu0 0.0
    %743 = vmatprep.subr.mxu0 0.0
    %744 = vmatpush1.msra.mxu0 0.0
    %745 = vmatprep.subr.mxu0 0.0
    %746 = vmatpush1.msra.mxu0 0.0
    %747 = vmatprep.subr.mxu0 0.0
    %748 = vmatpush1.msra.mxu0 0.0
    %749 = vmatprep.subr.mxu0 0.0
    %750 = vmatpush1.msra.mxu0 0.0
    %751 = vmatprep.mubr.f32.mxu0 0.0
    %752 = vmatmul.mubr.f32.gmra.mrb[0].mxu0 %v685
    %v753 = vpop.f32.mrb[0].mxu0
    %v754 = vadd.f32 0.0, %v753
    %v755 = vpop.f32.mrb[0].mxu0
    %756 = vdwg.mxu0
    %757 = vmatprep.subr.mxu0 0.0
    %758 = vmatpush1.xpose.msra.mxu0 %v363
    %759 = vmatprep.subr.mxu0 0.0
    %760 = vmatpush1.xpose.msra.mxu0 0.0
    %761 = vmatprep.subr.mxu0 0.0
    %762 = vmatpush1.xpose.msra.mxu0 0.0
    %763 = vmatprep.subr.mxu0 0.0
    %764 = vmatpush1.xpose.msra.mxu0 0.0
    %765 = vmatprep.subr.mxu0 0.0
    %766 = vmatpush1.xpose.msra.mxu0 0.0
    %767 = vmatprep.subr.mxu0 0.0
    %768 = vmatpush1.xpose.msra.mxu0 0.0
    %769 = vmatprep.subr.mxu0 0.0
    %770 = vmatpush1.xpose.msra.mxu0 0.0
    %771 = vmatprep.subr.mxu0 0.0
    %772 = vmatpush1.xpose.msra.mxu0 0.0
    %773 = vmatprep.subr.mxu0 0.0
    %774 = vmatpush1.xpose.msra.mxu0 0.0
    %775 = vmatprep.subr.mxu0 0.0
    %776 = vmatpush1.xpose.msra.mxu0 0.0
    %777 = vmatprep.subr.mxu0 0.0
    %778 = vmatpush1.xpose.msra.mxu0 0.0
    %779 = vmatprep.subr.mxu0 0.0
    %780 = vmatpush1.xpose.msra.mxu0 0.0
    %781 = vmatprep.subr.mxu0 0.0
    %782 = vmatpush1.xpose.msra.mxu0 0.0
    %783 = vmatprep.subr.mxu0 0.0
    %784 = vmatpush1.xpose.msra.mxu0 0.0
    %785 = vmatprep.subr.mxu0 0.0
    %786 = vmatpush1.xpose.msra.mxu0 0.0
    %787 = vmatprep.subr.mxu0 0.0
    %788 = vmatpush1.xpose.msra.mxu0 0.0
    %789 = vmatprep.subr.mxu0 0.0
    %790 = vmatpush1.xpose.msra.mxu0 0.0
    %791 = vmatprep.subr.mxu0 0.0
    %792 = vmatpush1.xpose.msra.mxu0 0.0
    %793 = vmatprep.subr.mxu0 0.0
    %794 = vmatpush1.xpose.msra.mxu0 0.0
    %795 = vmatprep.subr.mxu0 0.0
    %796 = vmatpush1.xpose.msra.mxu0 0.0
    %797 = vmatprep.subr.mxu0 0.0
    %798 = vmatpush1.xpose.msra.mxu0 0.0
    %799 = vmatprep.subr.mxu0 0.0
    %800 = vmatpush1.xpose.msra.mxu0 0.0
    %801 = vmatprep.subr.mxu0 0.0
    %802 = vmatpush1.xpose.msra.mxu0 0.0
    %803 = vmatprep.subr.mxu0 0.0
    %804 = vmatpush1.xpose.msra.mxu0 0.0
    %805 = vmatprep.subr.mxu0 0.0
    %806 = vmatpush1.xpose.msra.mxu0 0.0
    %807 = vmatprep.subr.mxu0 0.0
    %808 = vmatpush1.xpose.msra.mxu0 0.0
    %809 = vmatprep.subr.mxu0 0.0
    %810 = vmatpush1.xpose.msra.mxu0 0.0
    %811 = vmatprep.subr.mxu0 0.0
    %812 = vmatpush1.xpose.msra.mxu0 0.0
    %813 = vmatprep.subr.mxu0 0.0
    %814 = vmatpush1.xpose.msra.mxu0 0.0
    %815 = vmatprep.subr.mxu0 0.0
    %816 = vmatpush1.xpose.msra.mxu0 0.0
    %817 = vmatprep.subr.mxu0 0.0
    %818 = vmatpush1.xpose.msra.mxu0 0.0
    %819 = vmatprep.subr.mxu0 0.0
    %820 = vmatpush1.xpose.msra.mxu0 0.0
    %821 = vmatprep.mubr.f32.mxu0 0.0
    %822 = vmatmul.mubr.f32.gmra.mrb[0].mxu0 %v209
    %v823 = vpop.f32.mrb[0].mxu0
    %v824 = vadd.f32 0.0, %v823
    %v825 = vpop.f32.mrb[0].mxu0
    %826 = vdwg.mxu0
    %v827 = vsel %vm672, %v824, -inf
    %828 = vmax.xlane.f32.xlu0 %v827
    %v829 = vpop.xlane.xlu0 %828
    %v830 = vsub.f32 %v824, %v829
    %v831 = vmul.f32 %v830, 1.442695
    %v832 = vpow.pop %v831
    %v833 = vsel %vm672, %v832, 0.0
    %834 = vadd.xlane.f32.xlu0 %v833
    %v835 = vpop.xlane.xlu0 %834
    %v836 = vrcp.pop %v835
    %v837 = vmul.f32 %v832, %v836
    %v839 = vsel %vm672, %v837, 0
    %841 = vmatprep.subr.mxu0 0.0
    %842 = vmatpush1.msra.mxu0 %v517
    %843 = vmatprep.subr.mxu0 0.0
    %844 = vmatpush1.msra.mxu0 0.0
    %845 = vmatprep.subr.mxu0 0.0
    %846 = vmatpush1.msra.mxu0 0.0
    %847 = vmatprep.subr.mxu0 0.0
    %848 = vmatpush1.msra.mxu0 0.0
    %849 = vmatprep.subr.mxu0 0.0
    %850 = vmatpush1.msra.mxu0 0.0
    %851 = vmatprep.subr.mxu0 0.0
    %852 = vmatpush1.msra.mxu0 0.0
    %853 = vmatprep.subr.mxu0 0.0
    %854 = vmatpush1.msra.mxu0 0.0
    %855 = vmatprep.subr.mxu0 0.0
    %856 = vmatpush1.msra.mxu0 0.0
    %857 = vmatprep.subr.mxu0 0.0
    %858 = vmatpush1.msra.mxu0 0.0
    %859 = vmatprep.subr.mxu0 0.0
    %860 = vmatpush1.msra.mxu0 0.0
    %861 = vmatprep.subr.mxu0 0.0
    %862 = vmatpush1.msra.mxu0 0.0
    %863 = vmatprep.subr.mxu0 0.0
    %864 = vmatpush1.msra.mxu0 0.0
    %865 = vmatprep.subr.mxu0 0.0
    %866 = vmatpush1.msra.mxu0 0.0
    %867 = vmatprep.subr.mxu0 0.0
    %868 = vmatpush1.msra.mxu0 0.0
    %869 = vmatprep.subr.mxu0 0.0
    %870 = vmatpush1.msra.mxu0 0.0
    %871 = vmatprep.subr.mxu0 0.0
    %872 = vmatpush1.msra.mxu0 0.0
    %873 = vmatprep.subr.mxu0 0.0
    %874 = vmatpush1.msra.mxu0 0.0
    %875 = vmatprep.subr.mxu0 0.0
    %876 = vmatpush1.msra.mxu0 0.0
    %877 = vmatprep.subr.mxu0 0.0
    %878 = vmatpush1.msra.mxu0 0.0
    %879 = vmatprep.subr.mxu0 0.0
    %880 = vmatpush1.msra.mxu0 0.0
    %881 = vmatprep.subr.mxu0 0.0
    %882 = vmatpush1.msra.mxu0 0.0
    %883 = vmatprep.subr.mxu0 0.0
    %884 = vmatpush1.msra.mxu0 0.0
    %885 = vmatprep.subr.mxu0 0.0
    %886 = vmatpush1.msra.mxu0 0.0
    %887 = vmatprep.subr.mxu0 0.0
    %888 = vmatpush1.msra.mxu0 0.0
    %889 = vmatprep.subr.mxu0 0.0
    %890 = vmatpush1.msra.mxu0 0.0
    %891 = vmatprep.subr.mxu0 0.0
    %892 = vmatpush1.msra.mxu0 0.0
    %893 = vmatprep.subr.mxu0 0.0
    %894 = vmatpush1.msra.mxu0 0.0
    %895 = vmatprep.subr.mxu0 0.0
    %896 = vmatpush1.msra.mxu0 0.0
    %897 = vmatprep.subr.mxu0 0.0
    %898 = vmatpush1.msra.mxu0 0.0
    %899 = vmatprep.subr.mxu0 0.0
    %900 = vmatpush1.msra.mxu0 0.0
    %901 = vmatprep.subr.mxu0 0.0
    %902 = vmatpush1.msra.mxu0 0.0
    %903 = vmatprep.subr.mxu0 0.0
    %904 = vmatpush1.msra.mxu0 0.0
    %905 = vmatprep.mubr.f32.mxu0 0.0
    %906 = vmatmul.mubr.f32.gmra.mrb[0].mxu0 %v839
    %v907 = vpop.f32.mrb[0].mxu0
    %v908 = vadd.f32 0.0, %v907
    %v909 = vpop.f32.mrb[0].mxu0
    %910 = vdwg.mxu0
    %911 = vmatprep.subr.mxu0 0.0
    %912 = vmatpush1.msra.mxu0 %v84
    %913 = vmatprep.subr.mxu0 0.0
    %914 = vmatpush1.msra.mxu0 %v85
    %915 = vmatprep.subr.mxu0 0.0
    %916 = vmatpush1.msra.mxu0 %v86
    %917 = vmatprep.subr.mxu0 0.0
    %918 = vmatpush1.msra.mxu0 %v87
    %919 = vmatprep.subr.mxu0 0.0
    %920 = vmatpush1.msra.mxu0 %v88
    %921 = vmatprep.subr.mxu0 0.0
    %922 = vmatpush1.msra.mxu0 %v89
    %923 = vmatprep.subr.mxu0 0.0
    %924 = vmatpush1.msra.mxu0 %v90
    %925 = vmatprep.subr.mxu0 0.0
    %926 = vmatpush1.msra.mxu0 %v91
    %927 = vmatprep.subr.mxu0 0.0
    %928 = vmatpush1.msra.mxu0 %v92
    %929 = vmatprep.subr.mxu0 0.0
    %930 = vmatpush1.msra.mxu0 %v93
    %931 = vmatprep.subr.mxu0 0.0
    %932 = vmatpush1.msra.mxu0 %v94
    %933 = vmatprep.subr.mxu0 0.0
    %934 = vmatpush1.msra.mxu0 %v95
    %935 = vmatprep.subr.mxu0 0.0
    %936 = vmatpush1.msra.mxu0 %v96
    %937 = vmatprep.subr.mxu0 0.0
    %938 = vmatpush1.msra.mxu0 %v97
    %939 = vmatprep.subr.mxu0 0.0
    %940 = vmatpush1.msra.mxu0 %v98
    %941 = vmatprep.subr.mxu0 0.0
    %942 = vmatpush1.msra.mxu0 %v99
    %943 = vmatprep.subr.mxu0 0.0
    %944 = vmatpush1.msra.mxu0 0.0
    %945 = vmatprep.subr.mxu0 0.0
    %946 = vmatpush1.msra.mxu0 0.0
    %947 = vmatprep.subr.mxu0 0.0
    %948 = vmatpush1.msra.mxu0 0.0
    %949 = vmatprep.subr.mxu0 0.0
    %950 = vmatpush1.msra.mxu0 0.0
    %951 = vmatprep.subr.mxu0 0.0
    %952 = vmatpush1.msra.mxu0 0.0
    %953 = vmatprep.subr.mxu0 0.0
    %954 = vmatpush1.msra.mxu0 0.0
    %955 = vmatprep.subr.mxu0 0.0
    %956 = vmatpush1.msra.mxu0 0.0
    %957 = vmatprep.subr.mxu0 0.0
    %958 = vmatpush1.msra.mxu0 0.0
    %959 = vmatprep.subr.mxu0 0.0
    %960 = vmatpush1.msra.mxu0 0.0
    %961 = vmatprep.subr.mxu0 0.0
    %962 = vmatpush1.msra.mxu0 0.0
    %963 = vmatprep.subr.mxu0 0.0
    %964 = vmatpush1.msra.mxu0 0.0
    %965 = vmatprep.subr.mxu0 0.0
    %966 = vmatpush1.msra.mxu0 0.0
    %967 = vmatprep.subr.mxu0 0.0
    %968 = vmatpush1.msra.mxu0 0.0
    %969 = vmatprep.subr.mxu0 0.0
    %970 = vmatpush1.msra.mxu0 0.0
    %971 = vmatprep.subr.mxu0 0.0
    %972 = vmatpush1.msra.mxu0 0.0
    %973 = vmatprep.subr.mxu0 0.0
    %974 = vmatpush1.msra.mxu0 0.0
    %975 = vmatprep.mubr.f32.mxu0 0.0
    %976 = vmatmul.mubr.f32.gmra.mrb[0].mxu0 %v908
    %v977 = vpop.f32.mrb[0].mxu0
    %v978 = vadd.f32 0.0, %v977
    %v979 = vpop.f32.mrb[0].mxu0
    %980 = vdwg.mxu0
    %981 = vmatprep.subr.mxu0 0.0
    %982 = vmatpush1.msra.mxu0 %v68
    %983 = vmatprep.subr.mxu0 0.0
    %984 = vmatpush1.msra.mxu0 %v69
    %985 = vmatprep.subr.mxu0 0.0
    %986 = vmatpush1.msra.mxu0 %v70
    %987 = vmatprep.subr.mxu0 0.0
    %988 = vmatpush1.msra.mxu0 %v71
    %989 = vmatprep.subr.mxu0 0.0
    %990 = vmatpush1.msra.mxu0 %v72
    %991 = vmatprep.subr.mxu0 0.0
    %992 = vmatpush1.msra.mxu0 %v73
    %993 = vmatprep.subr.mxu0 0.0
    %994 = vmatpush1.msra.mxu0 %v74
    %995 = vmatprep.subr.mxu0 0.0
    %996 = vmatpush1.msra.mxu0 %v75
    %997 = vmatprep.subr.mxu0 0.0
    %998 = vmatpush1.msra.mxu0 %v76
    %999 = vmatprep.subr.mxu0 0.0
    %1000 = vmatpush1.msra.mxu0 %v77
    %1001 = vmatprep.subr.mxu0 0.0
    %1002 = vmatpush1.msra.mxu0 %v78
    %1003 = vmatprep.subr.mxu0 0.0
    %1004 = vmatpush1.msra.mxu0 %v79
    %1005 = vmatprep.subr.mxu0 0.0
    %1006 = vmatpush1.msra.mxu0 %v80
    %1007 = vmatprep.subr.mxu0 0.0
    %1008 = vmatpush1.msra.mxu0 %v81
    %1009 = vmatprep.subr.mxu0 0.0
    %1010 = vmatpush1.msra.mxu0 %v82
    %1011 = vmatprep.subr.mxu0 0.0
    %1012 = vmatpush1.msra.mxu0 %v83
    %1013 = vmatprep.subr.mxu0 0.0
    %1014 = vmatpush1.msra.mxu0 0.0
    %1015 = vmatprep.subr.mxu0 0.0
    %1016 = vmatpush1.msra.mxu0 0.0
    %1017 = vmatprep.subr.mxu0 0.0
    %1018 = vmatpush1.msra.mxu0 0.0
    %1019 = vmatprep.subr.mxu0 0.0
    %1020 = vmatpush1.msra.mxu0 0.0
    %1021 = vmatprep.subr.mxu0 0.0
    %1022 = vmatpush1.msra.mxu0 0.0
    %1023 = vmatprep.subr.mxu0 0.0
    %1024 = vmatpush1.msra.mxu0 0.0
    %1025 = vmatprep.subr.mxu0 0.0
    %1026 = vmatpush1.msra.mxu0 0.0
    %1027 = vmatprep.subr.mxu0 0.0
    %1028 = vmatpush1.msra.mxu0 0.0
    %1029 = vmatprep.subr.mxu0 0.0
    %1030 = vmatpush1.msra.mxu0 0.0
    %1031 = vmatprep.subr.mxu0 0.0
    %1032 = vmatpush1.msra.mxu0 0.0
    %1033 = vmatprep.subr.mxu0 0.0
    %1034 = vmatpush1.msra.mxu0 0.0
    %1035 = vmatprep.subr.mxu0 0.0
    %1036 = vmatpush1.msra.mxu0 0.0
    %1037 = vmatprep.subr.mxu0 0.0
    %1038 = vmatpush1.msra.mxu0 0.0
    %1039 = vmatprep.subr.mxu0 0.0
    %1040 = vmatpush1.msra.mxu0 0.0
    %1041 = vmatprep.subr.mxu0 0.0
    %1042 = vmatpush1.msra.mxu0 0.0
    %1043 = vmatprep.subr.mxu0 0.0
    %1044 = vmatpush1.msra.mxu0 0.0
    %1045 = vmatprep.mubr.f32.mxu0 0.0
    %1046 = vmatmul.mubr.f32.gmra.mrb[0].mxu0 %v754
    %v1047 = vpop.f32.mrb[0].mxu0
    %v1048 = vadd.f32 %v978, %v1047
    %v1049 = vpop.f32.mrb[0].mxu0
    %1050 = vdwg.mxu0
    %1051 = vmatprep.subr.mxu0 0.0
    %1052 = vmatpush1.xpose.msra.mxu0 %v438
    %1053 = vmatprep.subr.mxu0 0.0
    %1054 = vmatpush1.xpose.msra.mxu0 0.0
    %1055 = vmatprep.subr.mxu0 0.0
    %1056 = vmatpush1.xpose.msra.mxu0 0.0
    %1057 = vmatprep.subr.mxu0 0.0
    %1058 = vmatpush1.xpose.msra.mxu0 0.0
    %1059 = vmatprep.subr.mxu0 0.0
    %1060 = vmatpush1.xpose.msra.mxu0 0.0
    %1061 = vmatprep.subr.mxu0 0.0
    %1062 = vmatpush1.xpose.msra.mxu0 0.0
    %1063 = vmatprep.subr.mxu0 0.0
    %1064 = vmatpush1.xpose.msra.mxu0 0.0
    %1065 = vmatprep.subr.mxu0 0.0
    %1066 = vmatpush1.xpose.msra.mxu0 0.0
    %1067 = vmatprep.subr.mxu0 0.0
    %1068 = vmatpush1.xpose.msra.mxu0 0.0
    %1069 = vmatprep.subr.mxu0 0.0
    %1070 = vmatpush1.xpose.msra.mxu0 0.0
    %1071 = vmatprep.subr.mxu0 0.0
    %1072 = vmatpush1.xpose.msra.mxu0 0.0
    %1073 = vmatprep.subr.mxu0 0.0
    %1074 = vmatpush1.xpose.msra.mxu0 0.0
    %1075 = vmatprep.subr.mxu0 0.0
    %1076 = vmatpush1.xpose.msra.mxu0 0.0
    %1077 = vmatprep.subr.mxu0 0.0
    %1078 = vmatpush1.xpose.msra.mxu0 0.0
    %1079 = vmatprep.subr.mxu0 0.0
    %1080 = vmatpush1.xpose.msra.mxu0 0.0
    %1081 = vmatprep.subr.mxu0 0.0
    %1082 = vmatpush1.xpose.msra.mxu0 0.0
    %1083 = vmatprep.subr.mxu0 0.0
    %1084 = vmatpush1.xpose.msra.mxu0 0.0
    %1085 = vmatprep.subr.mxu0 0.0
    %1086 = vmatpush1.xpose.msra.mxu0 0.0
    %1087 = vmatprep.subr.mxu0 0.0
    %1088 = vmatpush1.xpose.msra.mxu0 0.0
    %1089 = vmatprep.subr.mxu0 0.0
    %1090 = vmatpush1.xpose.msra.mxu0 0.0
    %1091 = vmatprep.subr.mxu0 0.0
    %1092 = vmatpush1.xpose.msra.mxu0 0.0
    %1093 = vmatprep.subr.mxu0 0.0
    %1094 = vmatpush1.xpose.msra.mxu0 0.0
    %1095 = vmatprep.subr.mxu0 0.0
    %1096 = vmatpush1.xpose.msra.mxu0 0.0
    %1097 = vmatprep.subr.mxu0 0.0
    %1098 = vmatpush1.xpose.msra.mxu0 0.0
    %1099 = vmatprep.subr.mxu0 0.0
    %1100 = vmatpush1.xpose.msra.mxu0 0.0
    %1101 = vmatprep.subr.mxu0 0.0
    %1102 = vmatpush1.xpose.msra.mxu0 0.0
    %1103 = vmatprep.subr.mxu0 0.0
    %1104 = vmatpush1.xpose.msra.mxu0 0.0
    %1105 = vmatprep.subr.mxu0 0.0
    %1106 = vmatpush1.xpose.msra.mxu0 0.0
    %1107 = vmatprep.subr.mxu0 0.0
    %1108 = vmatpush1.xpose.msra.mxu0 0.0
    %1109 = vmatprep.subr.mxu0 0.0
    %1110 = vmatpush1.xpose.msra.mxu0 0.0
    %1111 = vmatprep.subr.mxu0 0.0
    %1112 = vmatpush1.xpose.msra.mxu0 0.0
    %1113 = vmatprep.subr.mxu0 0.0
    %1114 = vmatpush1.xpose.msra.mxu0 0.0
    %1115 = vmatprep.mubr.f32.mxu0 0.0
    %1116 = vmatmul.mubr.f32.gmra.mrb[0].mxu0 %v284
    %v1117 = vpop.f32.mrb[0].mxu0
    %v1118 = vadd.f32 0.0, %v1117
    %v1119 = vpop.f32.mrb[0].mxu0
    %1120 = vdwg.mxu0
    %v1121 = vsel %vm672, %v1118, -inf
    %1122 = vmax.xlane.f32.xlu0 %v1121
    %v1123 = vpop.xlane.xlu0 %1122
    %v1124 = vsub.f32 %v1118, %v1123
    %v1125 = vmul.f32 %v1124, 1.442695
    %v1126 = vpow.pop %v1125
    %v1127 = vsel %vm672, %v1126, 0.0
    %1128 = vadd.xlane.f32.xlu0 %v1127
    %v1129 = vpop.xlane.xlu0 %1128
    %v1130 = vrcp.pop %v1129
    %v1131 = vmul.f32 %v1126, %v1130
    %v1133 = vsel %vm672, %v1131, 0
    %1135 = vmatprep.subr.mxu0 0.0
    %1136 = vmatpush1.msra.mxu0 %v592
    %1137 = vmatprep.subr.mxu0 0.0
    %1138 = vmatpush1.msra.mxu0 0.0
    %1139 = vmatprep.subr.mxu0 0.0
    %1140 = vmatpush1.msra.mxu0 0.0
    %1141 = vmatprep.subr.mxu0 0.0
    %1142 = vmatpush1.msra.mxu0 0.0
    %1143 = vmatprep.subr.mxu0 0.0
    %1144 = vmatpush1.msra.mxu0 0.0
    %1145 = vmatprep.subr.mxu0 0.0
    %1146 = vmatpush1.msra.mxu0 0.0
    %1147 = vmatprep.subr.mxu0 0.0
    %1148 = vmatpush1.msra.mxu0 0.0
    %1149 = vmatprep.subr.mxu0 0.0
    %1150 = vmatpush1.msra.mxu0 0.0
    %1151 = vmatprep.subr.mxu0 0.0
    %1152 = vmatpush1.msra.mxu0 0.0
    %1153 = vmatprep.subr.mxu0 0.0
    %1154 = vmatpush1.msra.mxu0 0.0
    %1155 = vmatprep.subr.mxu0 0.0
    %1156 = vmatpush1.msra.mxu0 0.0
    %1157 = vmatprep.subr.mxu0 0.0
    %1158 = vmatpush1.msra.mxu0 0.0
    %1159 = vmatprep.subr.mxu0 0.0
    %1160 = vmatpush1.msra.mxu0 0.0
    %1161 = vmatprep.subr.mxu0 0.0
    %1162 = vmatpush1.msra.mxu0 0.0
    %1163 = vmatprep.subr.mxu0 0.0
    %1164 = vmatpush1.msra.mxu0 0.0
    %1165 = vmatprep.subr.mxu0 0.0
    %1166 = vmatpush1.msra.mxu0 0.0
    %1167 = vmatprep.subr.mxu0 0.0
    %1168 = vmatpush1.msra.mxu0 0.0
    %1169 = vmatprep.subr.mxu0 0.0
    %1170 = vmatpush1.msra.mxu0 0.0
    %1171 = vmatprep.subr.mxu0 0.0
    %1172 = vmatpush1.msra.mxu0 0.0
    %1173 = vmatprep.subr.mxu0 0.0
    %1174 = vmatpush1.msra.mxu0 0.0
    %1175 = vmatprep.subr.mxu0 0.0
    %1176 = vmatpush1.msra.mxu0 0.0
    %1177 = vmatprep.subr.mxu0 0.0
    %1178 = vmatpush1.msra.mxu0 0.0
    %1179 = vmatprep.subr.mxu0 0.0
    %1180 = vmatpush1.msra.mxu0 0.0
    %1181 = vmatprep.subr.mxu0 0.0
    %1182 = vmatpush1.msra.mxu0 0.0
    %1183 = vmatprep.subr.mxu0 0.0
    %1184 = vmatpush1.msra.mxu0 0.0
    %1185 = vmatprep.subr.mxu0 0.0
    %1186 = vmatpush1.msra.mxu0 0.0
    %1187 = vmatprep.subr.mxu0 0.0
    %1188 = vmatpush1.msra.mxu0 0.0
    %1189 = vmatprep.subr.mxu0 0.0
    %1190 = vmatpush1.msra.mxu0 0.0
    %1191 = vmatprep.subr.mxu0 0.0
    %1192 = vmatpush1.msra.mxu0 0.0
    %1193 = vmatprep.subr.mxu0 0.0
    %1194 = vmatpush1.msra.mxu0 0.0
    %1195 = vmatprep.subr.mxu0 0.0
    %1196 = vmatpush1.msra.mxu0 0.0
    %1197 = vmatprep.subr.mxu0 0.0
    %1198 = vmatpush1.msra.mxu0 0.0
    %1199 = vmatprep.mubr.f32.mxu0 0.0
    %1200 = vmatmul.mubr.f32.gmra.mrb[0].mxu0 %v1133
    %v1201 = vpop.f32.mrb[0].mxu0
    %v1202 = vadd.f32 0.0, %v1201
    %v1203 = vpop.f32.mrb[0].mxu0
    %1204 = vdwg.mxu0
    %1205 = vmatprep.subr.mxu0 0.0
    %1206 = vmatpush1.msra.mxu0 %v100
    %1207 = vmatprep.subr.mxu0 0.0
    %1208 = vmatpush1.msra.mxu0 %v101
    %1209 = vmatprep.subr.mxu0 0.0
    %1210 = vmatpush1.msra.mxu0 %v102
    %1211 = vmatprep.subr.mxu0 0.0
    %1212 = vmatpush1.msra.mxu0 %v103
    %1213 = vmatprep.subr.mxu0 0.0
    %1214 = vmatpush1.msra.mxu0 %v104
    %1215 = vmatprep.subr.mxu0 0.0
    %1216 = vmatpush1.msra.mxu0 %v105
    %1217 = vmatprep.subr.mxu0 0.0
    %1218 = vmatpush1.msra.mxu0 %v106
    %1219 = vmatprep.subr.mxu0 0.0
    %1220 = vmatpush1.msra.mxu0 %v107
    %1221 = vmatprep.subr.mxu0 0.0
    %1222 = vmatpush1.msra.mxu0 %v108
    %1223 = vmatprep.subr.mxu0 0.0
    %1224 = vmatpush1.msra.mxu0 %v109
    %1225 = vmatprep.subr.mxu0 0.0
    %1226 = vmatpush1.msra.mxu0 %v110
    %1227 = vmatprep.subr.mxu0 0.0
    %1228 = vmatpush1.msra.mxu0 %v111
    %1229 = vmatprep.subr.mxu0 0.0
    %1230 = vmatpush1.msra.mxu0 %v112
    %1231 = vmatprep.subr.mxu0 0.0
    %1232 = vmatpush1.msra.mxu0 %v113
    %1233 = vmatprep.subr.mxu0 0.0
    %1234 = vmatpush1.msra.mxu0 %v114
    %1235 = vmatprep.subr.mxu0 0.0
    %1236 = vmatpush1.msra.mxu0 %v115
    %1237 = vmatprep.subr.mxu0 0.0
    %1238 = vmatpush1.msra.mxu0 0.0
    %1239 = vmatprep.subr.mxu0 0.0
    %1240 = vmatpush1.msra.mxu0 0.0
    %1241 = vmatprep.subr.mxu0 0.0
    %1242 = vmatpush1.msra.mxu0 0.0
    %1243 = vmatprep.subr.mxu0 0.0
    %1244 = vmatpush1.msra.mxu0 0.0
    %1245 = vmatprep.subr.mxu0 0.0
    %1246 = vmatpush1.msra.mxu0 0.0
    %1247 = vmatprep.subr.mxu0 0.0
    %1248 = vmatpush1.msra.mxu0 0.0
    %1249 = vmatprep.subr.mxu0 0.0
    %1250 = vmatpush1.msra.mxu0 0.0
    %1251 = vmatprep.subr.mxu0 0.0
    %1252 = vmatpush1.msra.mxu0 0.0
    %1253 = vmatprep.subr.mxu0 0.0
    %1254 = vmatpush1.msra.mxu0 0.0
    %1255 = vmatprep.subr.mxu0 0.0
    %1256 = vmatpush1.msra.mxu0 0.0
    %1257 = vmatprep.subr.mxu0 0.0
    %1258 = vmatpush1.msra.mxu0 0.0
    %1259 = vmatprep.subr.mxu0 0.0
    %1260 = vmatpush1.msra.mxu0 0.0
    %1261 = vmatprep.subr.mxu0 0.0
    %1262 = vmatpush1.msra.mxu0 0.0
    %1263 = vmatprep.subr.mxu0 0.0
    %1264 = vmatpush1.msra.mxu0 0.0
    %1265 = vmatprep.subr.mxu0 0.0
    %1266 = vmatpush1.msra.mxu0 0.0
    %1267 = vmatprep.subr.mxu0 0.0
    %1268 = vmatpush1.msra.mxu0 0.0
    %1269 = vmatprep.mubr.f32.mxu0 0.0
    %1270 = vmatmul.mubr.f32.gmra.mrb[0].mxu0 %v1202
    %v1271 = vpop.f32.mrb[0].mxu0
    %v1272 = vadd.f32 0.0, %v1271
    %v1273 = vpop.f32.mrb[0].mxu0
    %1274 = vdwg.mxu0
    %v1275 = vadd.f32 %v1048, %v1272
    %1276 = vmatprep.subr.mxu0 0.0
    %1277 = vmatpush1.xpose.msra.mxu0 %v440
    %1278 = vmatprep.subr.mxu0 0.0
    %1279 = vmatpush1.xpose.msra.mxu0 0.0
    %1280 = vmatprep.subr.mxu0 0.0
    %1281 = vmatpush1.xpose.msra.mxu0 0.0
    %1282 = vmatprep.subr.mxu0 0.0
    %1283 = vmatpush1.xpose.msra.mxu0 0.0
    %1284 = vmatprep.subr.mxu0 0.0
    %1285 = vmatpush1.xpose.msra.mxu0 0.0
    %1286 = vmatprep.subr.mxu0 0.0
    %1287 = vmatpush1.xpose.msra.mxu0 0.0
    %1288 = vmatprep.subr.mxu0 0.0
    %1289 = vmatpush1.xpose.msra.mxu0 0.0
    %1290 = vmatprep.subr.mxu0 0.0
    %1291 = vmatpush1.xpose.msra.mxu0 0.0
    %1292 = vmatprep.subr.mxu0 0.0
    %1293 = vmatpush1.xpose.msra.mxu0 0.0
    %1294 = vmatprep.subr.mxu0 0.0
    %1295 = vmatpush1.xpose.msra.mxu0 0.0
    %1296 = vmatprep.subr.mxu0 0.0
    %1297 = vmatpush1.xpose.msra.mxu0 0.0
    %1298 = vmatprep.subr.mxu0 0.0
    %1299 = vmatpush1.xpose.msra.mxu0 0.0
    %1300 = vmatprep.subr.mxu0 0.0
    %1301 = vmatpush1.xpose.msra.mxu0 0.0
    %1302 = vmatprep.subr.mxu0 0.0
    %1303 = vmatpush1.xpose.msra.mxu0 0.0
    %1304 = vmatprep.subr.mxu0 0.0
    %1305 = vmatpush1.xpose.msra.mxu0 0.0
    %1306 = vmatprep.subr.mxu0 0.0
    %1307 = vmatpush1.xpose.msra.mxu0 0.0
    %1308 = vmatprep.subr.mxu0 0.0
    %1309 = vmatpush1.xpose.msra.mxu0 0.0
    %1310 = vmatprep.subr.mxu0 0.0
    %1311 = vmatpush1.xpose.msra.mxu0 0.0
    %1312 = vmatprep.subr.mxu0 0.0
    %1313 = vmatpush1.xpose.msra.mxu0 0.0
    %1314 = vmatprep.subr.mxu0 0.0
    %1315 = vmatpush1.xpose.msra.mxu0 0.0
    %1316 = vmatprep.subr.mxu0 0.0
    %1317 = vmatpush1.xpose.msra.mxu0 0.0
    %1318 = vmatprep.subr.mxu0 0.0
    %1319 = vmatpush1.xpose.msra.mxu0 0.0
    %1320 = vmatprep.subr.mxu0 0.0
    %1321 = vmatpush1.xpose.msra.mxu0 0.0
    %1322 = vmatprep.subr.mxu0 0.0
    %1323 = vmatpush1.xpose.msra.mxu0 0.0
    %1324 = vmatprep.subr.mxu0 0.0
    %1325 = vmatpush1.xpose.msra.mxu0 0.0
    %1326 = vmatprep.subr.mxu0 0.0
    %1327 = vmatpush1.xpose.msra.mxu0 0.0
    %1328 = vmatprep.subr.mxu0 0.0
    %1329 = vmatpush1.xpose.msra.mxu0 0.0
    %1330 = vmatprep.subr.mxu0 0.0
    %1331 = vmatpush1.xpose.msra.mxu0 0.0
    %1332 = vmatprep.subr.mxu0 0.0
    %1333 = vmatpush1.xpose.msra.mxu0 0.0
    %1334 = vmatprep.subr.mxu0 0.0
    %1335 = vmatpush1.xpose.msra.mxu0 0.0
    %1336 = vmatprep.subr.mxu0 0.0
    %1337 = vmatpush1.xpose.msra.mxu0 0.0
    %1338 = vmatprep.subr.mxu0 0.0
    %1339 = vmatpush1.xpose.msra.mxu0 0.0
    %1340 = vmatprep.mubr.f32.mxu0 0.0
    %1341 = vmatmul.mubr.f32.gmra.mrb[0].mxu0 %v286
    %v1342 = vpop.f32.mrb[0].mxu0
    %v1343 = vadd.f32 0.0, %v1342
    %v1344 = vpop.f32.mrb[0].mxu0
    %1345 = vdwg.mxu0
    %v1346 = vsel %vm672, %v1343, -inf
    %1347 = vmax.xlane.f32.xlu0 %v1346
    %v1348 = vpop.xlane.xlu0 %1347
    %v1349 = vsub.f32 %v1343, %v1348
    %v1350 = vmul.f32 %v1349, 1.442695
    %v1351 = vpow.pop %v1350
    %v1352 = vsel %vm672, %v1351, 0.0
    %1353 = vadd.xlane.f32.xlu0 %v1352
    %v1354 = vpop.xlane.xlu0 %1353
    %v1355 = vrcp.pop %v1354
    %v1356 = vmul.f32 %v1351, %v1355
    %v1358 = vsel %vm672, %v1356, 0
    %1360 = vmatprep.subr.mxu0 0.0
    %1361 = vmatpush1.msra.mxu0 %v594
    %1362 = vmatprep.subr.mxu0 0.0
    %1363 = vmatpush1.msra.mxu0 0.0
    %1364 = vmatprep.subr.mxu0 0.0
    %1365 = vmatpush1.msra.mxu0 0.0
    %1366 = vmatprep.subr.mxu0 0.0
    %1367 = vmatpush1.msra.mxu0 0.0
    %1368 = vmatprep.subr.mxu0 0.0
    %1369 = vmatpush1.msra.mxu0 0.0
    %1370 = vmatprep.subr.mxu0 0.0
    %1371 = vmatpush1.msra.mxu0 0.0
    %1372 = vmatprep.subr.mxu0 0.0
    %1373 = vmatpush1.msra.mxu0 0.0
    %1374 = vmatprep.subr.mxu0 0.0
    %1375 = vmatpush1.msra.mxu0 0.0
    %1376 = vmatprep.subr.mxu0 0.0
    %1377 = vmatpush1.msra.mxu0 0.0
    %1378 = vmatprep.subr.mxu0 0.0
    %1379 = vmatpush1.msra.mxu0 0.0
    %1380 = vmatprep.subr.mxu0 0.0
    %1381 = vmatpush1.msra.mxu0 0.0
    %1382 = vmatprep.subr.mxu0 0.0
    %1383 = vmatpush1.msra.mxu0 0.0
    %1384 = vmatprep.subr.mxu0 0.0
    %1385 = vmatpush1.msra.mxu0 0.0
    %1386 = vmatprep.subr.mxu0 0.0
    %1387 = vmatpush1.msra.mxu0 0.0
    %1388 = vmatprep.subr.mxu0 0.0
    %1389 = vmatpush1.msra.mxu0 0.0
    %1390 = vmatprep.subr.mxu0 0.0
    %1391 = vmatpush1.msra.mxu0 0.0
    %1392 = vmatprep.subr.mxu0 0.0
    %1393 = vmatpush1.msra.mxu0 0.0
    %1394 = vmatprep.subr.mxu0 0.0
    %1395 = vmatpush1.msra.mxu0 0.0
    %1396 = vmatprep.subr.mxu0 0.0
    %1397 = vmatpush1.msra.mxu0 0.0
    %1398 = vmatprep.subr.mxu0 0.0
    %1399 = vmatpush1.msra.mxu0 0.0
    %1400 = vmatprep.subr.mxu0 0.0
    %1401 = vmatpush1.msra.mxu0 0.0
    %1402 = vmatprep.subr.mxu0 0.0
    %1403 = vmatpush1.msra.mxu0 0.0
    %1404 = vmatprep.subr.mxu0 0.0
    %1405 = vmatpush1.msra.mxu0 0.0
    %1406 = vmatprep.subr.mxu0 0.0
    %1407 = vmatpush1.msra.mxu0 0.0
    %1408 = vmatprep.subr.mxu0 0.0
    %1409 = vmatpush1.msra.mxu0 0.0
    %1410 = vmatprep.subr.mxu0 0.0
    %1411 = vmatpush1.msra.mxu0 0.0
    %1412 = vmatprep.subr.mxu0 0.0
    %1413 = vmatpush1.msra.mxu0 0.0
    %1414 = vmatprep.subr.mxu0 0.0
    %1415 = vmatpush1.msra.mxu0 0.0
    %1416 = vmatprep.subr.mxu0 0.0
    %1417 = vmatpush1.msra.mxu0 0.0
    %1418 = vmatprep.subr.mxu0 0.0
    %1419 = vmatpush1.msra.mxu0 0.0
    %1420 = vmatprep.subr.mxu0 0.0
    %1421 = vmatpush1.msra.mxu0 0.0
    %1422 = vmatprep.subr.mxu0 0.0
    %1423 = vmatpush1.msra.mxu0 0.0
    %1424 = vmatprep.mubr.f32.mxu0 0.0
    %1425 = vmatmul.mubr.f32.gmra.mrb[0].mxu0 %v1358
    %v1426 = vpop.f32.mrb[0].mxu0
    %v1427 = vadd.f32 0.0, %v1426
    %v1428 = vpop.f32.mrb[0].mxu0
    %1429 = vdwg.mxu0
    %1430 = vmatprep.subr.mxu0 0.0
    %1431 = vmatpush1.msra.mxu0 %v116
    %1432 = vmatprep.subr.mxu0 0.0
    %1433 = vmatpush1.msra.mxu0 %v117
    %1434 = vmatprep.subr.mxu0 0.0
    %1435 = vmatpush1.msra.mxu0 %v118
    %1436 = vmatprep.subr.mxu0 0.0
    %1437 = vmatpush1.msra.mxu0 %v119
    %1438 = vmatprep.subr.mxu0 0.0
    %1439 = vmatpush1.msra.mxu0 %v120
    %1440 = vmatprep.subr.mxu0 0.0
    %1441 = vmatpush1.msra.mxu0 %v121
    %1442 = vmatprep.subr.mxu0 0.0
    %1443 = vmatpush1.msra.mxu0 %v122
    %1444 = vmatprep.subr.mxu0 0.0
    %1445 = vmatpush1.msra.mxu0 %v123
    %1446 = vmatprep.subr.mxu0 0.0
    %1447 = vmatpush1.msra.mxu0 %v124
    %1448 = vmatprep.subr.mxu0 0.0
    %1449 = vmatpush1.msra.mxu0 %v125
    %1450 = vmatprep.subr.mxu0 0.0
    %1451 = vmatpush1.msra.mxu0 %v126
    %1452 = vmatprep.subr.mxu0 0.0
    %1453 = vmatpush1.msra.mxu0 %v127
    %1454 = vmatprep.subr.mxu0 0.0
    %1455 = vmatpush1.msra.mxu0 %v128
    %1456 = vmatprep.subr.mxu0 0.0
    %1457 = vmatpush1.msra.mxu0 %v129
    %1458 = vmatprep.subr.mxu0 0.0
    %1459 = vmatpush1.msra.mxu0 %v130
    %1460 = vmatprep.subr.mxu0 0.0
    %1461 = vmatpush1.msra.mxu0 %v131
    %1462 = vmatprep.subr.mxu0 0.0
    %1463 = vmatpush1.msra.mxu0 0.0
    %1464 = vmatprep.subr.mxu0 0.0
    %1465 = vmatpush1.msra.mxu0 0.0
    %1466 = vmatprep.subr.mxu0 0.0
    %1467 = vmatpush1.msra.mxu0 0.0
    %1468 = vmatprep.subr.mxu0 0.0
    %1469 = vmatpush1.msra.mxu0 0.0
    %1470 = vmatprep.subr.mxu0 0.0
    %1471 = vmatpush1.msra.mxu0 0.0
    %1472 = vmatprep.subr.mxu0 0.0
    %1473 = vmatpush1.msra.mxu0 0.0
    %1474 = vmatprep.subr.mxu0 0.0
    %1475 = vmatpush1.msra.mxu0 0.0
    %1476 = vmatprep.subr.mxu0 0.0
    %1477 = vmatpush1.msra.mxu0 0.0
    %1478 = vmatprep.subr.mxu0 0.0
    %1479 = vmatpush1.msra.mxu0 0.0
    %1480 = vmatprep.subr.mxu0 0.0
    %1481 = vmatpush1.msra.mxu0 0.0
    %1482 = vmatprep.subr.mxu0 0.0
    %1483 = vmatpush1.msra.mxu0 0.0
    %1484 = vmatprep.subr.mxu0 0.0
    %1485 = vmatpush1.msra.mxu0 0.0
    %1486 = vmatprep.subr.mxu0 0.0
    %1487 = vmatpush1.msra.mxu0 0.0
    %1488 = vmatprep.subr.mxu0 0.0
    %1489 = vmatpush1.msra.mxu0 0.0
    %1490 = vmatprep.subr.mxu0 0.0
    %1491 = vmatpush1.msra.mxu0 0.0
    %1492 = vmatprep.subr.mxu0 0.0
    %1493 = vmatpush1.msra.mxu0 0.0
    %1494 = vmatprep.mubr.f32.mxu0 0.0
    %1495 = vmatmul.mubr.f32.gmra.mrb[0].mxu0 %v1427
    %v1496 = vpop.f32.mrb[0].mxu0
    %v1497 = vadd.f32 0.0, %v1496
    %v1498 = vpop.f32.mrb[0].mxu0
    %1499 = vdwg.mxu0
    %v1500 = vadd.f32 %v1275, %v1497
    %v1502 = vlaneseq
    %v1503 = vshrl.u32 %v1502, 7
    %v1504 = vsub.s32 0, %v1503
    %v1505 = vrot.slane %v132, %v1504
    %v1507 = vadd.f32 %v1500, %v1505
    %1508 = vst.msk [vmem:[#allocation2] sm:$0xff] %vm133, %v1507
    %1509 = vmatprep.subr.mxu0 0.0
    %1510 = vmatpush1.xpose.msra.mxu0 %v367
    %1511 = vmatprep.subr.mxu0 0.0
    %1512 = vmatpush1.xpose.msra.mxu0 0.0
    %1513 = vmatprep.subr.mxu0 0.0
    %1514 = vmatpush1.xpose.msra.mxu0 0.0
    %1515 = vmatprep.subr.mxu0 0.0
    %1516 = vmatpush1.xpose.msra.mxu0 0.0
    %1517 = vmatprep.subr.mxu0 0.0
    %1518 = vmatpush1.xpose.msra.mxu0 0.0
    %1519 = vmatprep.subr.mxu0 0.0
    %1520 = vmatpush1.xpose.msra.mxu0 0.0
    %1521 = vmatprep.subr.mxu0 0.0
    %1522 = vmatpush1.xpose.msra.mxu0 0.0
    %1523 = vmatprep.subr.mxu0 0.0
    %1524 = vmatpush1.xpose.msra.mxu0 0.0
    %1525 = vmatprep.subr.mxu0 0.0
    %1526 = vmatpush1.xpose.msra.mxu0 0.0
    %1527 = vmatprep.subr.mxu0 0.0
    %1528 = vmatpush1.xpose.msra.mxu0 0.0
    %1529 = vmatprep.subr.mxu0 0.0
    %1530 = vmatpush1.xpose.msra.mxu0 0.0
    %1531 = vmatprep.subr.mxu0 0.0
    %1532 = vmatpush1.xpose.msra.mxu0 0.0
    %1533 = vmatprep.subr.mxu0 0.0
    %1534 = vmatpush1.xpose.msra.mxu0 0.0
    %1535 = vmatprep.subr.mxu0 0.0
    %1536 = vmatpush1.xpose.msra.mxu0 0.0
    %1537 = vmatprep.subr.mxu0 0.0
    %1538 = vmatpush1.xpose.msra.mxu0 0.0
    %1539 = vmatprep.subr.mxu0 0.0
    %1540 = vmatpush1.xpose.msra.mxu0 0.0
    %1541 = vmatprep.subr.mxu0 0.0
    %1542 = vmatpush1.xpose.msra.mxu0 0.0
    %1543 = vmatprep.subr.mxu0 0.0
    %1544 = vmatpush1.xpose.msra.mxu0 0.0
    %1545 = vmatprep.subr.mxu0 0.0
    %1546 = vmatpush1.xpose.msra.mxu0 0.0
    %1547 = vmatprep.subr.mxu0 0.0
    %1548 = vmatpush1.xpose.msra.mxu0 0.0
    %1549 = vmatprep.subr.mxu0 0.0
    %1550 = vmatpush1.xpose.msra.mxu0 0.0
    %1551 = vmatprep.subr.mxu0 0.0
    %1552 = vmatpush1.xpose.msra.mxu0 0.0
    %1553 = vmatprep.subr.mxu0 0.0
    %1554 = vmatpush1.xpose.msra.mxu0 0.0
    %1555 = vmatprep.subr.mxu0 0.0
    %1556 = vmatpush1.xpose.msra.mxu0 0.0
    %1557 = vmatprep.subr.mxu0 0.0
    %1558 = vmatpush1.xpose.msra.mxu0 0.0
    %1559 = vmatprep.subr.mxu0 0.0
    %1560 = vmatpush1.xpose.msra.mxu0 0.0
    %1561 = vmatprep.subr.mxu0 0.0
    %1562 = vmatpush1.xpose.msra.mxu0 0.0
    %1563 = vmatprep.subr.mxu0 0.0
    %1564 = vmatpush1.xpose.msra.mxu0 0.0
    %1565 = vmatprep.subr.mxu0 0.0
    %1566 = vmatpush1.xpose.msra.mxu0 0.0
    %1567 = vmatprep.subr.mxu0 0.0
    %1568 = vmatpush1.xpose.msra.mxu0 0.0
    %1569 = vmatprep.subr.mxu0 0.0
    %1570 = vmatpush1.xpose.msra.mxu0 0.0
    %1571 = vmatprep.subr.mxu0 0.0
    %1572 = vmatpush1.xpose.msra.mxu0 0.0
    %1573 = vmatprep.mubr.f32.mxu0 0.0
    %1574 = vmatmul.mubr.f32.gmra.mrb[0].mxu0 %v213
    %v1575 = vpop.f32.mrb[0].mxu0
    %v1576 = vadd.f32 0.0, %v1575
    %v1577 = vpop.f32.mrb[0].mxu0
    %1578 = vdwg.mxu0
    %v1579 = vsel %vm672, %v1576, -inf
    %1580 = vmax.xlane.f32.xlu0 %v1579
    %v1581 = vpop.xlane.xlu0 %1580
    %v1582 = vsub.f32 %v1576, %v1581
    %v1583 = vmul.f32 %v1582, 1.442695
    %v1584 = vpow.pop %v1583
    %v1585 = vsel %vm672, %v1584, 0.0
    %1586 = vadd.xlane.f32.xlu0 %v1585
    %v1587 = vpop.xlane.xlu0 %1586
    %v1588 = vrcp.pop %v1587
    %v1589 = vmul.f32 %v1584, %v1588
    %v1591 = vsel %vm672, %v1589, 0
    %1593 = vmatprep.subr.mxu0 0.0
    %1594 = vmatpush1.msra.mxu0 %v521
    %1595 = vmatprep.subr.mxu0 0.0
    %1596 = vmatpush1.msra.mxu0 0.0
    %1597 = vmatprep.subr.mxu0 0.0
    %1598 = vmatpush1.msra.mxu0 0.0
    %1599 = vmatprep.subr.mxu0 0.0
    %1600 = vmatpush1.msra.mxu0 0.0
    %1601 = vmatprep.subr.mxu0 0.0
    %1602 = vmatpush1.msra.mxu0 0.0
    %1603 = vmatprep.subr.mxu0 0.0
    %1604 = vmatpush1.msra.mxu0 0.0
    %1605 = vmatprep.subr.mxu0 0.0
    %1606 = vmatpush1.msra.mxu0 0.0
    %1607 = vmatprep.subr.mxu0 0.0
    %1608 = vmatpush1.msra.mxu0 0.0
    %1609 = vmatprep.subr.mxu0 0.0
    %1610 = vmatpush1.msra.mxu0 0.0
    %1611 = vmatprep.subr.mxu0 0.0
    %1612 = vmatpush1.msra.mxu0 0.0
    %1613 = vmatprep.subr.mxu0 0.0
    %1614 = vmatpush1.msra.mxu0 0.0
    %1615 = vmatprep.subr.mxu0 0.0
    %1616 = vmatpush1.msra.mxu0 0.0
    %1617 = vmatprep.subr.mxu0 0.0
    %1618 = vmatpush1.msra.mxu0 0.0
    %1619 = vmatprep.subr.mxu0 0.0
    %1620 = vmatpush1.msra.mxu0 0.0
    %1621 = vmatprep.subr.mxu0 0.0
    %1622 = vmatpush1.msra.mxu0 0.0
    %1623 = vmatprep.subr.mxu0 0.0
    %1624 = vmatpush1.msra.mxu0 0.0
    %1625 = vmatprep.subr.mxu0 0.0
    %1626 = vmatpush1.msra.mxu0 0.0
    %1627 = vmatprep.subr.mxu0 0.0
    %1628 = vmatpush1.msra.mxu0 0.0
    %1629 = vmatprep.subr.mxu0 0.0
    %1630 = vmatpush1.msra.mxu0 0.0
    %1631 = vmatprep.subr.mxu0 0.0
    %1632 = vmatpush1.msra.mxu0 0.0
    %1633 = vmatprep.subr.mxu0 0.0
    %1634 = vmatpush1.msra.mxu0 0.0
    %1635 = vmatprep.subr.mxu0 0.0
    %1636 = vmatpush1.msra.mxu0 0.0
    %1637 = vmatprep.subr.mxu0 0.0
    %1638 = vmatpush1.msra.mxu0 0.0
    %1639 = vmatprep.subr.mxu0 0.0
    %1640 = vmatpush1.msra.mxu0 0.0
    %1641 = vmatprep.subr.mxu0 0.0
    %1642 = vmatpush1.msra.mxu0 0.0
    %1643 = vmatprep.subr.mxu0 0.0
    %1644 = vmatpush1.msra.mxu0 0.0
    %1645 = vmatprep.subr.mxu0 0.0
    %1646 = vmatpush1.msra.mxu0 0.0
    %1647 = vmatprep.subr.mxu0 0.0
    %1648 = vmatpush1.msra.mxu0 0.0
    %1649 = vmatprep.subr.mxu0 0.0
    %1650 = vmatpush1.msra.mxu0 0.0
    %1651 = vmatprep.subr.mxu0 0.0
    %1652 = vmatpush1.msra.mxu0 0.0
    %1653 = vmatprep.subr.mxu0 0.0
    %1654 = vmatpush1.msra.mxu0 0.0
    %1655 = vmatprep.subr.mxu0 0.0
    %1656 = vmatpush1.msra.mxu0 0.0
    %1657 = vmatprep.mubr.f32.mxu0 0.0
    %1658 = vmatmul.mubr.f32.gmra.mrb[0].mxu0 %v1591
    %v1659 = vpop.f32.mrb[0].mxu0
    %v1660 = vadd.f32 0.0, %v1659
    %v1661 = vpop.f32.mrb[0].mxu0
    %1662 = vdwg.mxu0
    %1663 = vmatprep.subr.mxu0 0.0
    %1664 = vmatpush1.xpose.msra.mxu0 %v369
    %1665 = vmatprep.subr.mxu0 0.0
    %1666 = vmatpush1.xpose.msra.mxu0 0.0
    %1667 = vmatprep.subr.mxu0 0.0
    %1668 = vmatpush1.xpose.msra.mxu0 0.0
    %1669 = vmatprep.subr.mxu0 0.0
    %1670 = vmatpush1.xpose.msra.mxu0 0.0
    %1671 = vmatprep.subr.mxu0 0.0
    %1672 = vmatpush1.xpose.msra.mxu0 0.0
    %1673 = vmatprep.subr.mxu0 0.0
    %1674 = vmatpush1.xpose.msra.mxu0 0.0
    %1675 = vmatprep.subr.mxu0 0.0
    %1676 = vmatpush1.xpose.msra.mxu0 0.0
    %1677 = vmatprep.subr.mxu0 0.0
    %1678 = vmatpush1.xpose.msra.mxu0 0.0
    %1679 = vmatprep.subr.mxu0 0.0
    %1680 = vmatpush1.xpose.msra.mxu0 0.0
    %1681 = vmatprep.subr.mxu0 0.0
    %1682 = vmatpush1.xpose.msra.mxu0 0.0
    %1683 = vmatprep.subr.mxu0 0.0
    %1684 = vmatpush1.xpose.msra.mxu0 0.0
    %1685 = vmatprep.subr.mxu0 0.0
    %1686 = vmatpush1.xpose.msra.mxu0 0.0
    %1687 = vmatprep.subr.mxu0 0.0
    %1688 = vmatpush1.xpose.msra.mxu0 0.0
    %1689 = vmatprep.subr.mxu0 0.0
    %1690 = vmatpush1.xpose.msra.mxu0 0.0
    %1691 = vmatprep.subr.mxu0 0.0
    %1692 = vmatpush1.xpose.msra.mxu0 0.0
    %1693 = vmatprep.subr.mxu0 0.0
    %1694 = vmatpush1.xpose.msra.mxu0 0.0
    %1695 = vmatprep.subr.mxu0 0.0
    %1696 = vmatpush1.xpose.msra.mxu0 0.0
    %1697 = vmatprep.subr.mxu0 0.0
    %1698 = vmatpush1.xpose.msra.mxu0 0.0
    %1699 = vmatprep.subr.mxu0 0.0
    %1700 = vmatpush1.xpose.msra.mxu0 0.0
    %1701 = vmatprep.subr.mxu0 0.0
    %1702 = vmatpush1.xpose.msra.mxu0 0.0
    %1703 = vmatprep.subr.mxu0 0.0
    %1704 = vmatpush1.xpose.msra.mxu0 0.0
    %1705 = vmatprep.subr.mxu0 0.0
    %1706 = vmatpush1.xpose.msra.mxu0 0.0
    %1707 = vmatprep.subr.mxu0 0.0
    %1708 = vmatpush1.xpose.msra.mxu0 0.0
    %1709 = vmatprep.subr.mxu0 0.0
    %1710 = vmatpush1.xpose.msra.mxu0 0.0
    %1711 = vmatprep.subr.mxu0 0.0
    %1712 = vmatpush1.xpose.msra.mxu0 0.0
    %1713 = vmatprep.subr.mxu0 0.0
    %1714 = vmatpush1.xpose.msra.mxu0 0.0
    %1715 = vmatprep.subr.mxu0 0.0
    %1716 = vmatpush1.xpose.msra.mxu0 0.0
    %1717 = vmatprep.subr.mxu0 0.0
    %1718 = vmatpush1.xpose.msra.mxu0 0.0
    %1719 = vmatprep.subr.mxu0 0.0
    %1720 = vmatpush1.xpose.msra.mxu0 0.0
    %1721 = vmatprep.subr.mxu0 0.0
    %1722 = vmatpush1.xpose.msra.mxu0 0.0
    %1723 = vmatprep.subr.mxu0 0.0
    %1724 = vmatpush1.xpose.msra.mxu0 0.0
    %1725 = vmatprep.subr.mxu0 0.0
    %1726 = vmatpush1.xpose.msra.mxu0 0.0
    %1727 = vmatprep.mubr.f32.mxu0 0.0
    %1728 = vmatmul.mubr.f32.gmra.mrb[0].mxu0 %v215
    %v1729 = vpop.f32.mrb[0].mxu0
    %v1730 = vadd.f32 0.0, %v1729
    %v1731 = vpop.f32.mrb[0].mxu0
    %1732 = vdwg.mxu0
    %v1733 = vsel %vm672, %v1730, -inf
    %1734 = vmax.xlane.f32.xlu0 %v1733
    %v1735 = vpop.xlane.xlu0 %1734
    %v1736 = vsub.f32 %v1730, %v1735
    %v1737 = vmul.f32 %v1736, 1.442695
    %v1738 = vpow.pop %v1737
    %v1739 = vsel %vm672, %v1738, 0.0
    %1740 = vadd.xlane.f32.xlu0 %v1739
    %v1741 = vpop.xlane.xlu0 %1740
    %v1742 = vrcp.pop %v1741
    %v1743 = vmul.f32 %v1738, %v1742
    %v1745 = vsel %vm672, %v1743, 0
    %1747 = vmatprep.subr.mxu0 0.0
    %1748 = vmatpush1.msra.mxu0 %v523
    %1749 = vmatprep.subr.mxu0 0.0
    %1750 = vmatpush1.msra.mxu0 0.0
    %1751 = vmatprep.subr.mxu0 0.0
    %1752 = vmatpush1.msra.mxu0 0.0
    %1753 = vmatprep.subr.mxu0 0.0
    %1754 = vmatpush1.msra.mxu0 0.0
    %1755 = vmatprep.subr.mxu0 0.0
    %1756 = vmatpush1.msra.mxu0 0.0
    %1757 = vmatprep.subr.mxu0 0.0
    %1758 = vmatpush1.msra.mxu0 0.0
    %1759 = vmatprep.subr.mxu0 0.0
    %1760 = vmatpush1.msra.mxu0 0.0
    %1761 = vmatprep.subr.mxu0 0.0
    %1762 = vmatpush1.msra.mxu0 0.0
    %1763 = vmatprep.subr.mxu0 0.0
    %1764 = vmatpush1.msra.mxu0 0.0
    %1765 = vmatprep.subr.mxu0 0.0
    %1766 = vmatpush1.msra.mxu0 0.0
    %1767 = vmatprep.subr.mxu0 0.0
    %1768 = vmatpush1.msra.mxu0 0.0
    %1769 = vmatprep.subr.mxu0 0.0
    %1770 = vmatpush1.msra.mxu0 0.0
    %1771 = vmatprep.subr.mxu0 0.0
    %1772 = vmatpush1.msra.mxu0 0.0
    %1773 = vmatprep.subr.mxu0 0.0
    %1774 = vmatpush1.msra.mxu0 0.0
    %1775 = vmatprep.subr.mxu0 0.0
    %1776 = vmatpush1.msra.mxu0 0.0
    %1777 = vmatprep.subr.mxu0 0.0
    %1778 = vmatpush1.msra.mxu0 0.0
    %1779 = vmatprep.subr.mxu0 0.0
    %1780 = vmatpush1.msra.mxu0 0.0
    %1781 = vmatprep.subr.mxu0 0.0
    %1782 = vmatpush1.msra.mxu0 0.0
    %1783 = vmatprep.subr.mxu0 0.0
    %1784 = vmatpush1.msra.mxu0 0.0
    %1785 = vmatprep.subr.mxu0 0.0
    %1786 = vmatpush1.msra.mxu0 0.0
    %1787 = vmatprep.subr.mxu0 0.0
    %1788 = vmatpush1.msra.mxu0 0.0
    %1789 = vmatprep.subr.mxu0 0.0
    %1790 = vmatpush1.msra.mxu0 0.0
    %1791 = vmatprep.subr.mxu0 0.0
    %1792 = vmatpush1.msra.mxu0 0.0
    %1793 = vmatprep.subr.mxu0 0.0
    %1794 = vmatpush1.msra.mxu0 0.0
    %1795 = vmatprep.subr.mxu0 0.0
    %1796 = vmatpush1.msra.mxu0 0.0
    %1797 = vmatprep.subr.mxu0 0.0
    %1798 = vmatpush1.msra.mxu0 0.0
    %1799 = vmatprep.subr.mxu0 0.0
    %1800 = vmatpush1.msra.mxu0 0.0
    %1801 = vmatprep.subr.mxu0 0.0
    %1802 = vmatpush1.msra.mxu0 0.0
    %1803 = vmatprep.subr.mxu0 0.0
    %1804 = vmatpush1.msra.mxu0 0.0
    %1805 = vmatprep.subr.mxu0 0.0
    %1806 = vmatpush1.msra.mxu0 0.0
    %1807 = vmatprep.subr.mxu0 0.0
    %1808 = vmatpush1.msra.mxu0 0.0
    %1809 = vmatprep.subr.mxu0 0.0
    %1810 = vmatpush1.msra.mxu0 0.0
    %1811 = vmatprep.mubr.f32.mxu0 0.0
    %1812 = vmatmul.mubr.f32.gmra.mrb[0].mxu0 %v1745
    %v1813 = vpop.f32.mrb[0].mxu0
    %v1814 = vadd.f32 0.0, %v1813
    %v1815 = vpop.f32.mrb[0].mxu0
    %1816 = vdwg.mxu0
    %1817 = vmatprep.subr.mxu0 0.0
    %1818 = vmatpush1.msra.mxu0 %v84
    %1819 = vmatprep.subr.mxu0 0.0
    %1820 = vmatpush1.msra.mxu0 %v85
    %1821 = vmatprep.subr.mxu0 0.0
    %1822 = vmatpush1.msra.mxu0 %v86
    %1823 = vmatprep.subr.mxu0 0.0
    %1824 = vmatpush1.msra.mxu0 %v87
    %1825 = vmatprep.subr.mxu0 0.0
    %1826 = vmatpush1.msra.mxu0 %v88
    %1827 = vmatprep.subr.mxu0 0.0
    %1828 = vmatpush1.msra.mxu0 %v89
    %1829 = vmatprep.subr.mxu0 0.0
    %1830 = vmatpush1.msra.mxu0 %v90
    %1831 = vmatprep.subr.mxu0 0.0
    %1832 = vmatpush1.msra.mxu0 %v91
    %1833 = vmatprep.subr.mxu0 0.0
    %1834 = vmatpush1.msra.mxu0 %v92
    %1835 = vmatprep.subr.mxu0 0.0
    %1836 = vmatpush1.msra.mxu0 %v93
    %1837 = vmatprep.subr.mxu0 0.0
    %1838 = vmatpush1.msra.mxu0 %v94
    %1839 = vmatprep.subr.mxu0 0.0
    %1840 = vmatpush1.msra.mxu0 %v95
    %1841 = vmatprep.subr.mxu0 0.0
    %1842 = vmatpush1.msra.mxu0 %v96
    %1843 = vmatprep.subr.mxu0 0.0
    %1844 = vmatpush1.msra.mxu0 %v97
    %1845 = vmatprep.subr.mxu0 0.0
    %1846 = vmatpush1.msra.mxu0 %v98
    %1847 = vmatprep.subr.mxu0 0.0
    %1848 = vmatpush1.msra.mxu0 %v99
    %1849 = vmatprep.subr.mxu0 0.0
    %1850 = vmatpush1.msra.mxu0 0.0
    %1851 = vmatprep.subr.mxu0 0.0
    %1852 = vmatpush1.msra.mxu0 0.0
    %1853 = vmatprep.subr.mxu0 0.0
    %1854 = vmatpush1.msra.mxu0 0.0
    %1855 = vmatprep.subr.mxu0 0.0
    %1856 = vmatpush1.msra.mxu0 0.0
    %1857 = vmatprep.subr.mxu0 0.0
    %1858 = vmatpush1.msra.mxu0 0.0
    %1859 = vmatprep.subr.mxu0 0.0
    %1860 = vmatpush1.msra.mxu0 0.0
    %1861 = vmatprep.subr.mxu0 0.0
    %1862 = vmatpush1.msra.mxu0 0.0
    %1863 = vmatprep.subr.mxu0 0.0
    %1864 = vmatpush1.msra.mxu0 0.0
    %1865 = vmatprep.subr.mxu0 0.0
    %1866 = vmatpush1.msra.mxu0 0.0
    %1867 = vmatprep.subr.mxu0 0.0
    %1868 = vmatpush1.msra.mxu0 0.0
    %1869 = vmatprep.subr.mxu0 0.0
    %1870 = vmatpush1.msra.mxu0 0.0
    %1871 = vmatprep.subr.mxu0 0.0
    %1872 = vmatpush1.msra.mxu0 0.0
    %1873 = vmatprep.subr.mxu0 0.0
    %1874 = vmatpush1.msra.mxu0 0.0
    %1875 = vmatprep.subr.mxu0 0.0
    %1876 = vmatpush1.msra.mxu0 0.0
    %1877 = vmatprep.subr.mxu0 0.0
    %1878 = vmatpush1.msra.mxu0 0.0
    %1879 = vmatprep.subr.mxu0 0.0
    %1880 = vmatpush1.msra.mxu0 0.0
    %1881 = vmatprep.mubr.f32.mxu0 0.0
    %1882 = vmatmul.mubr.f32.gmra.mrb[0].mxu0 %v1814
    %v1883 = vpop.f32.mrb[0].mxu0
    %v1884 = vadd.f32 0.0, %v1883
    %v1885 = vpop.f32.mrb[0].mxu0
    %1886 = vdwg.mxu0
    %1887 = vmatprep.subr.mxu0 0.0
    %1888 = vmatpush1.msra.mxu0 %v68
    %1889 = vmatprep.subr.mxu0 0.0
    %1890 = vmatpush1.msra.mxu0 %v69
    %1891 = vmatprep.subr.mxu0 0.0
    %1892 = vmatpush1.msra.mxu0 %v70
    %1893 = vmatprep.subr.mxu0 0.0
    %1894 = vmatpush1.msra.mxu0 %v71
    %1895 = vmatprep.subr.mxu0 0.0
    %1896 = vmatpush1.msra.mxu0 %v72
    %1897 = vmatprep.subr.mxu0 0.0
    %1898 = vmatpush1.msra.mxu0 %v73
    %1899 = vmatprep.subr.mxu0 0.0
    %1900 = vmatpush1.msra.mxu0 %v74
    %1901 = vmatprep.subr.mxu0 0.0
    %1902 = vmatpush1.msra.mxu0 %v75
    %1903 = vmatprep.subr.mxu0 0.0
    %1904 = vmatpush1.msra.mxu0 %v76
    %1905 = vmatprep.subr.mxu0 0.0
    %1906 = vmatpush1.msra.mxu0 %v77
    %1907 = vmatprep.subr.mxu0 0.0
    %1908 = vmatpush1.msra.mxu0 %v78
    %1909 = vmatprep.subr.mxu0 0.0
    %1910 = vmatpush1.msra.mxu0 %v79
    %1911 = vmatprep.subr.mxu0 0.0
    %1912 = vmatpush1.msra.mxu0 %v80
    %1913 = vmatprep.subr.mxu0 0.0
    %1914 = vmatpush1.msra.mxu0 %v81
    %1915 = vmatprep.subr.mxu0 0.0
    %1916 = vmatpush1.msra.mxu0 %v82
    %1917 = vmatprep.subr.mxu0 0.0
    %1918 = vmatpush1.msra.mxu0 %v83
    %1919 = vmatprep.subr.mxu0 0.0
    %1920 = vmatpush1.msra.mxu0 0.0
    %1921 = vmatprep.subr.mxu0 0.0
    %1922 = vmatpush1.msra.mxu0 0.0
    %1923 = vmatprep.subr.mxu0 0.0
    %1924 = vmatpush1.msra.mxu0 0.0
    %1925 = vmatprep.subr.mxu0 0.0
    %1926 = vmatpush1.msra.mxu0 0.0
    %1927 = vmatprep.subr.mxu0 0.0
    %1928 = vmatpush1.msra.mxu0 0.0
    %1929 = vmatprep.subr.mxu0 0.0
    %1930 = vmatpush1.msra.mxu0 0.0
    %1931 = vmatprep.subr.mxu0 0.0
    %1932 = vmatpush1.msra.mxu0 0.0
    %1933 = vmatprep.subr.mxu0 0.0
    %1934 = vmatpush1.msra.mxu0 0.0
    %1935 = vmatprep.subr.mxu0 0.0
    %1936 = vmatpush1.msra.mxu0 0.0
    %1937 = vmatprep.subr.mxu0 0.0
    %1938 = vmatpush1.msra.mxu0 0.0
    %1939 = vmatprep.subr.mxu0 0.0
    %1940 = vmatpush1.msra.mxu0 0.0
    %1941 = vmatprep.subr.mxu0 0.0
    %1942 = vmatpush1.msra.mxu0 0.0
    %1943 = vmatprep.subr.mxu0 0.0
    %1944 = vmatpush1.msra.mxu0 0.0
    %1945 = vmatprep.subr.mxu0 0.0
    %1946 = vmatpush1.msra.mxu0 0.0
    %1947 = vmatprep.subr.mxu0 0.0
    %1948 = vmatpush1.msra.mxu0 0.0
    %1949 = vmatprep.subr.mxu0 0.0
    %1950 = vmatpush1.msra.mxu0 0.0
    %1951 = vmatprep.mubr.f32.mxu0 0.0
    %1952 = vmatmul.mubr.f32.gmra.mrb[0].mxu0 %v1660
    %v1953 = vpop.f32.mrb[0].mxu0
    %v1954 = vadd.f32 %v1884, %v1953
    %v1955 = vpop.f32.mrb[0].mxu0
    %1956 = vdwg.mxu0
    %1957 = vmatprep.subr.mxu0 0.0
    %1958 = vmatpush1.xpose.msra.mxu0 %v444
    %1959 = vmatprep.subr.mxu0 0.0
    %1960 = vmatpush1.xpose.msra.mxu0 0.0
    %1961 = vmatprep.subr.mxu0 0.0
    %1962 = vmatpush1.xpose.msra.mxu0 0.0
    %1963 = vmatprep.subr.mxu0 0.0
    %1964 = vmatpush1.xpose.msra.mxu0 0.0
    %1965 = vmatprep.subr.mxu0 0.0
    %1966 = vmatpush1.xpose.msra.mxu0 0.0
    %1967 = vmatprep.subr.mxu0 0.0
    %1968 = vmatpush1.xpose.msra.mxu0 0.0
    %1969 = vmatprep.subr.mxu0 0.0
    %1970 = vmatpush1.xpose.msra.mxu0 0.0
    %1971 = vmatprep.subr.mxu0 0.0
    %1972 = vmatpush1.xpose.msra.mxu0 0.0
    %1973 = vmatprep.subr.mxu0 0.0
    %1974 = vmatpush1.xpose.msra.mxu0 0.0
    %1975 = vmatprep.subr.mxu0 0.0
    %1976 = vmatpush1.xpose.msra.mxu0 0.0
    %1977 = vmatprep.subr.mxu0 0.0
    %1978 = vmatpush1.xpose.msra.mxu0 0.0
    %1979 = vmatprep.subr.mxu0 0.0
    %1980 = vmatpush1.xpose.msra.mxu0 0.0
    %1981 = vmatprep.subr.mxu0 0.0
    %1982 = vmatpush1.xpose.msra.mxu0 0.0
    %1983 = vmatprep.subr.mxu0 0.0
    %1984 = vmatpush1.xpose.msra.mxu0 0.0
    %1985 = vmatprep.subr.mxu0 0.0
    %1986 = vmatpush1.xpose.msra.mxu0 0.0
    %1987 = vmatprep.subr.mxu0 0.0
    %1988 = vmatpush1.xpose.msra.mxu0 0.0
    %1989 = vmatprep.subr.mxu0 0.0
    %1990 = vmatpush1.xpose.msra.mxu0 0.0
    %1991 = vmatprep.subr.mxu0 0.0
    %1992 = vmatpush1.xpose.msra.mxu0 0.0
    %1993 = vmatprep.subr.mxu0 0.0
    %1994 = vmatpush1.xpose.msra.mxu0 0.0
    %1995 = vmatprep.subr.mxu0 0.0
    %1996 = vmatpush1.xpose.msra.mxu0 0.0
    %1997 = vmatprep.subr.mxu0 0.0
    %1998 = vmatpush1.xpose.msra.mxu0 0.0
    %1999 = vmatprep.subr.mxu0 0.0
    %2000 = vmatpush1.xpose.msra.mxu0 0.0
    %2001 = vmatprep.subr.mxu0 0.0
    %2002 = vmatpush1.xpose.msra.mxu0 0.0
    %2003 = vmatprep.subr.mxu0 0.0
    %2004 = vmatpush1.xpose.msra.mxu0 0.0
    %2005 = vmatprep.subr.mxu0 0.0
    %2006 = vmatpush1.xpose.msra.mxu0 0.0
    %2007 = vmatprep.subr.mxu0 0.0
    %2008 = vmatpush1.xpose.msra.mxu0 0.0
    %2009 = vmatprep.subr.mxu0 0.0
    %2010 = vmatpush1.xpose.msra.mxu0 0.0
    %2011 = vmatprep.subr.mxu0 0.0
    %2012 = vmatpush1.xpose.msra.mxu0 0.0
    %2013 = vmatprep.subr.mxu0 0.0
    %2014 = vmatpush1.xpose.msra.mxu0 0.0
    %2015 = vmatprep.subr.mxu0 0.0
    %2016 = vmatpush1.xpose.msra.mxu0 0.0
    %2017 = vmatprep.subr.mxu0 0.0
    %2018 = vmatpush1.xpose.msra.mxu0 0.0
    %2019 = vmatprep.subr.mxu0 0.0
    %2020 = vmatpush1.xpose.msra.mxu0 0.0
    %2021 = vmatprep.mubr.f32.mxu0 0.0
    %2022 = vmatmul.mubr.f32.gmra.mrb[0].mxu0 %v290
    %v2023 = vpop.f32.mrb[0].mxu0
    %v2024 = vadd.f32 0.0, %v2023
    %v2025 = vpop.f32.mrb[0].mxu0
    %2026 = vdwg.mxu0
    %v2027 = vsel %vm672, %v2024, -inf
    %2028 = vmax.xlane.f32.xlu0 %v2027
    %v2029 = vpop.xlane.xlu0 %2028
    %v2030 = vsub.f32 %v2024, %v2029
    %v2031 = vmul.f32 %v2030, 1.442695
    %v2032 = vpow.pop %v2031
    %v2033 = vsel %vm672, %v2032, 0.0
    %2034 = vadd.xlane.f32.xlu0 %v2033
    %v2035 = vpop.xlane.xlu0 %2034
    %v2036 = vrcp.pop %v2035
    %v2037 = vmul.f32 %v2032, %v2036
    %v2039 = vsel %vm672, %v2037, 0
    %2041 = vmatprep.subr.mxu0 0.0
    %2042 = vmatpush1.msra.mxu0 %v598
    %2043 = vmatprep.subr.mxu0 0.0
    %2044 = vmatpush1.msra.mxu0 0.0
    %2045 = vmatprep.subr.mxu0 0.0
    %2046 = vmatpush1.msra.mxu0 0.0
    %2047 = vmatprep.subr.mxu0 0.0
    %2048 = vmatpush1.msra.mxu0 0.0
    %2049 = vmatprep.subr.mxu0 0.0
    %2050 = vmatpush1.msra.mxu0 0.0
    %2051 = vmatprep.subr.mxu0 0.0
    %2052 = vmatpush1.msra.mxu0 0.0
    %2053 = vmatprep.subr.mxu0 0.0
    %2054 = vmatpush1.msra.mxu0 0.0
    %2055 = vmatprep.subr.mxu0 0.0
    %2056 = vmatpush1.msra.mxu0 0.0
    %2057 = vmatprep.subr.mxu0 0.0
    %2058 = vmatpush1.msra.mxu0 0.0
    %2059 = vmatprep.subr.mxu0 0.0
    %2060 = vmatpush1.msra.mxu0 0.0
    %2061 = vmatprep.subr.mxu0 0.0
    %2062 = vmatpush1.msra.mxu0 0.0
    %2063 = vmatprep.subr.mxu0 0.0
    %2064 = vmatpush1.msra.mxu0 0.0
    %2065 = vmatprep.subr.mxu0 0.0
    %2066 = vmatpush1.msra.mxu0 0.0
    %2067 = vmatprep.subr.mxu0 0.0
    %2068 = vmatpush1.msra.mxu0 0.0
    %2069 = vmatprep.subr.mxu0 0.0
    %2070 = vmatpush1.msra.mxu0 0.0
    %2071 = vmatprep.subr.mxu0 0.0
    %2072 = vmatpush1.msra.mxu0 0.0
    %2073 = vmatprep.subr.mxu0 0.0
    %2074 = vmatpush1.msra.mxu0 0.0
    %2075 = vmatprep.subr.mxu0 0.0
    %2076 = vmatpush1.msra.mxu0 0.0
    %2077 = vmatprep.subr.mxu0 0.0
    %2078 = vmatpush1.msra.mxu0 0.0
    %2079 = vmatprep.subr.mxu0 0.0
    %2080 = vmatpush1.msra.mxu0 0.0
    %2081 = vmatprep.subr.mxu0 0.0
    %2082 = vmatpush1.msra.mxu0 0.0
    %2083 = vmatprep.subr.mxu0 0.0
    %2084 = vmatpush1.msra.mxu0 0.0
    %2085 = vmatprep.subr.mxu0 0.0
    %2086 = vmatpush1.msra.mxu0 0.0
    %2087 = vmatprep.subr.mxu0 0.0
    %2088 = vmatpush1.msra.mxu0 0.0
    %2089 = vmatprep.subr.mxu0 0.0
    %2090 = vmatpush1.msra.mxu0 0.0
    %2091 = vmatprep.subr.mxu0 0.0
    %2092 = vmatpush1.msra.mxu0 0.0
    %2093 = vmatprep.subr.mxu0 0.0
    %2094 = vmatpush1.msra.mxu0 0.0
    %2095 = vmatprep.subr.mxu0 0.0
    %2096 = vmatpush1.msra.mxu0 0.0
    %2097 = vmatprep.subr.mxu0 0.0
    %2098 = vmatpush1.msra.mxu0 0.0
    %2099 = vmatprep.subr.mxu0 0.0
    %2100 = vmatpush1.msra.mxu0 0.0
    %2101 = vmatprep.subr.mxu0 0.0
    %2102 = vmatpush1.msra.mxu0 0.0
    %2103 = vmatprep.subr.mxu0 0.0
    %2104 = vmatpush1.msra.mxu0 0.0
    %2105 = vmatprep.mubr.f32.mxu0 0.0
    %2106 = vmatmul.mubr.f32.gmra.mrb[0].mxu0 %v2039
    %v2107 = vpop.f32.mrb[0].mxu0
    %v2108 = vadd.f32 0.0, %v2107
    %v2109 = vpop.f32.mrb[0].mxu0
    %2110 = vdwg.mxu0
    %2111 = vmatprep.subr.mxu0 0.0
    %2112 = vmatpush1.msra.mxu0 %v100
    %2113 = vmatprep.subr.mxu0 0.0
    %2114 = vmatpush1.msra.mxu0 %v101
    %2115 = vmatprep.subr.mxu0 0.0
    %2116 = vmatpush1.msra.mxu0 %v102
    %2117 = vmatprep.subr.mxu0 0.0
    %2118 = vmatpush1.msra.mxu0 %v103
    %2119 = vmatprep.subr.mxu0 0.0
    %2120 = vmatpush1.msra.mxu0 %v104
    %2121 = vmatprep.subr.mxu0 0.0
    %2122 = vmatpush1.msra.mxu0 %v105
    %2123 = vmatprep.subr.mxu0 0.0
    %2124 = vmatpush1.msra.mxu0 %v106
    %2125 = vmatprep.subr.mxu0 0.0
    %2126 = vmatpush1.msra.mxu0 %v107
    %2127 = vmatprep.subr.mxu0 0.0
    %2128 = vmatpush1.msra.mxu0 %v108
    %2129 = vmatprep.subr.mxu0 0.0
    %2130 = vmatpush1.msra.mxu0 %v109
    %2131 = vmatprep.subr.mxu0 0.0
    %2132 = vmatpush1.msra.mxu0 %v110
    %2133 = vmatprep.subr.mxu0 0.0
    %2134 = vmatpush1.msra.mxu0 %v111
    %2135 = vmatprep.subr.mxu0 0.0
    %2136 = vmatpush1.msra.mxu0 %v112
    %2137 = vmatprep.subr.mxu0 0.0
    %2138 = vmatpush1.msra.mxu0 %v113
    %2139 = vmatprep.subr.mxu0 0.0
    %2140 = vmatpush1.msra.mxu0 %v114
    %2141 = vmatprep.subr.mxu0 0.0
    %2142 = vmatpush1.msra.mxu0 %v115
    %2143 = vmatprep.subr.mxu0 0.0
    %2144 = vmatpush1.msra.mxu0 0.0
    %2145 = vmatprep.subr.mxu0 0.0
    %2146 = vmatpush1.msra.mxu0 0.0
    %2147 = vmatprep.subr.mxu0 0.0
    %2148 = vmatpush1.msra.mxu0 0.0
    %2149 = vmatprep.subr.mxu0 0.0
    %2150 = vmatpush1.msra.mxu0 0.0
    %2151 = vmatprep.subr.mxu0 0.0
    %2152 = vmatpush1.msra.mxu0 0.0
    %2153 = vmatprep.subr.mxu0 0.0
    %2154 = vmatpush1.msra.mxu0 0.0
    %2155 = vmatprep.subr.mxu0 0.0
    %2156 = vmatpush1.msra.mxu0 0.0
    %2157 = vmatprep.subr.mxu0 0.0
    %2158 = vmatpush1.msra.mxu0 0.0
    %2159 = vmatprep.subr.mxu0 0.0
    %2160 = vmatpush1.msra.mxu0 0.0
    %2161 = vmatprep.subr.mxu0 0.0
    %2162 = vmatpush1.msra.mxu0 0.0
    %2163 = vmatprep.subr.mxu0 0.0
    %2164 = vmatpush1.msra.mxu0 0.0
    %2165 = vmatprep.subr.mxu0 0.0
    %2166 = vmatpush1.msra.mxu0 0.0
    %2167 = vmatprep.subr.mxu0 0.0
    %2168 = vmatpush1.msra.mxu0 0.0
    %2169 = vmatprep.subr.mxu0 0.0
    %2170 = vmatpush1.msra.mxu0 0.0
    %2171 = vmatprep.subr.mxu0 0.0
    %2172 = vmatpush1.msra.mxu0 0.0
    %2173 = vmatprep.subr.mxu0 0.0
    %2174 = vmatpush1.msra.mxu0 0.0
    %2175 = vmatprep.mubr.f32.mxu0 0.0
    %2176 = vmatmul.mubr.f32.gmra.mrb[0].mxu0 %v2108
    %v2177 = vpop.f32.mrb[0].mxu0
    %v2178 = vadd.f32 0.0, %v2177
    %v2179 = vpop.f32.mrb[0].mxu0
    %2180 = vdwg.mxu0
    %v2181 = vadd.f32 %v1954, %v2178
    %2182 = vmatprep.subr.mxu0 0.0
    %2183 = vmatpush1.xpose.msra.mxu0 %v446
    %2184 = vmatprep.subr.mxu0 0.0
    %2185 = vmatpush1.xpose.msra.mxu0 0.0
    %2186 = vmatprep.subr.mxu0 0.0
    %2187 = vmatpush1.xpose.msra.mxu0 0.0
    %2188 = vmatprep.subr.mxu0 0.0
    %2189 = vmatpush1.xpose.msra.mxu0 0.0
    %2190 = vmatprep.subr.mxu0 0.0
    %2191 = vmatpush1.xpose.msra.mxu0 0.0
    %2192 = vmatprep.subr.mxu0 0.0
    %2193 = vmatpush1.xpose.msra.mxu0 0.0
    %2194 = vmatprep.subr.mxu0 0.0
    %2195 = vmatpush1.xpose.msra.mxu0 0.0
    %2196 = vmatprep.subr.mxu0 0.0
    %2197 = vmatpush1.xpose.msra.mxu0 0.0
    %2198 = vmatprep.subr.mxu0 0.0
    %2199 = vmatpush1.xpose.msra.mxu0 0.0
    %2200 = vmatprep.subr.mxu0 0.0
    %2201 = vmatpush1.xpose.msra.mxu0 0.0
    %2202 = vmatprep.subr.mxu0 0.0
    %2203 = vmatpush1.xpose.msra.mxu0 0.0
    %2204 = vmatprep.subr.mxu0 0.0
    %2205 = vmatpush1.xpose.msra.mxu0 0.0
    %2206 = vmatprep.subr.mxu0 0.0
    %2207 = vmatpush1.xpose.msra.mxu0 0.0
    %2208 = vmatprep.subr.mxu0 0.0
    %2209 = vmatpush1.xpose.msra.mxu0 0.0
    %2210 = vmatprep.subr.mxu0 0.0
    %2211 = vmatpush1.xpose.msra.mxu0 0.0
    %2212 = vmatprep.subr.mxu0 0.0
    %2213 = vmatpush1.xpose.msra.mxu0 0.0
    %2214 = vmatprep.subr.mxu0 0.0
    %2215 = vmatpush1.xpose.msra.mxu0 0.0
    %2216 = vmatprep.subr.mxu0 0.0
    %2217 = vmatpush1.xpose.msra.mxu0 0.0
    %2218 = vmatprep.subr.mxu0 0.0
    %2219 = vmatpush1.xpose.msra.mxu0 0.0
    %2220 = vmatprep.subr.mxu0 0.0
    %2221 = vmatpush1.xpose.msra.mxu0 0.0
    %2222 = vmatprep.subr.mxu0 0.0
    %2223 = vmatpush1.xpose.msra.mxu0 0.0
    %2224 = vmatprep.subr.mxu0 0.0
    %2225 = vmatpush1.xpose.msra.mxu0 0.0
    %2226 = vmatprep.subr.mxu0 0.0
    %2227 = vmatpush1.xpose.msra.mxu0 0.0
    %2228 = vmatprep.subr.mxu0 0.0
    %2229 = vmatpush1.xpose.msra.mxu0 0.0
    %2230 = vmatprep.subr.mxu0 0.0
    %2231 = vmatpush1.xpose.msra.mxu0 0.0
    %2232 = vmatprep.subr.mxu0 0.0
    %2233 = vmatpush1.xpose.msra.mxu0 0.0
    %2234 = vmatprep.subr.mxu0 0.0
    %2235 = vmatpush1.xpose.msra.mxu0 0.0
    %2236 = vmatprep.subr.mxu0 0.0
    %2237 = vmatpush1.xpose.msra.mxu0 0.0
    %2238 = vmatprep.subr.mxu0 0.0
    %2239 = vmatpush1.xpose.msra.mxu0 0.0
    %2240 = vmatprep.subr.mxu0 0.0
    %2241 = vmatpush1.xpose.msra.mxu0 0.0
    %2242 = vmatprep.subr.mxu0 0.0
    %2243 = vmatpush1.xpose.msra.mxu0 0.0
    %2244 = vmatprep.subr.mxu0 0.0
    %2245 = vmatpush1.xpose.msra.mxu0 0.0
    %2246 = vmatprep.mubr.f32.mxu0 0.0
    %2247 = vmatmul.mubr.f32.gmra.mrb[0].mxu0 %v292
    %v2248 = vpop.f32.mrb[0].mxu0
    %v2249 = vadd.f32 0.0, %v2248
    %v2250 = vpop.f32.mrb[0].mxu0
    %2251 = vdwg.mxu0
    %v2252 = vsel %vm672, %v2249, -inf
    %2253 = vmax.xlane.f32.xlu0 %v2252
    %v2254 = vpop.xlane.xlu0 %2253
    %v2255 = vsub.f32 %v2249, %v2254
    %v2256 = vmul.f32 %v2255, 1.442695
    %v2257 = vpow.pop %v2256
    %v2258 = vsel %vm672, %v2257, 0.0
    %2259 = vadd.xlane.f32.xlu0 %v2258
    %v2260 = vpop.xlane.xlu0 %2259
    %v2261 = vrcp.pop %v2260
    %v2262 = vmul.f32 %v2257, %v2261
    %v2264 = vsel %vm672, %v2262, 0
    %2266 = vmatprep.subr.mxu0 0.0
    %2267 = vmatpush1.msra.mxu0 %v600
    %2268 = vmatprep.subr.mxu0 0.0
    %2269 = vmatpush1.msra.mxu0 0.0
    %2270 = vmatprep.subr.mxu0 0.0
    %2271 = vmatpush1.msra.mxu0 0.0
    %2272 = vmatprep.subr.mxu0 0.0
    %2273 = vmatpush1.msra.mxu0 0.0
    %2274 = vmatprep.subr.mxu0 0.0
    %2275 = vmatpush1.msra.mxu0 0.0
    %2276 = vmatprep.subr.mxu0 0.0
    %2277 = vmatpush1.msra.mxu0 0.0
    %2278 = vmatprep.subr.mxu0 0.0
    %2279 = vmatpush1.msra.mxu0 0.0
    %2280 = vmatprep.subr.mxu0 0.0
    %2281 = vmatpush1.msra.mxu0 0.0
    %2282 = vmatprep.subr.mxu0 0.0
    %2283 = vmatpush1.msra.mxu0 0.0
    %2284 = vmatprep.subr.mxu0 0.0
    %2285 = vmatpush1.msra.mxu0 0.0
    %2286 = vmatprep.subr.mxu0 0.0
    %2287 = vmatpush1.msra.mxu0 0.0
    %2288 = vmatprep.subr.mxu0 0.0
    %2289 = vmatpush1.msra.mxu0 0.0
    %2290 = vmatprep.subr.mxu0 0.0
    %2291 = vmatpush1.msra.mxu0 0.0
    %2292 = vmatprep.subr.mxu0 0.0
    %2293 = vmatpush1.msra.mxu0 0.0
    %2294 = vmatprep.subr.mxu0 0.0
    %2295 = vmatpush1.msra.mxu0 0.0
    %2296 = vmatprep.subr.mxu0 0.0
    %2297 = vmatpush1.msra.mxu0 0.0
    %2298 = vmatprep.subr.mxu0 0.0
    %2299 = vmatpush1.msra.mxu0 0.0
    %2300 = vmatprep.subr.mxu0 0.0
    %2301 = vmatpush1.msra.mxu0 0.0
    %2302 = vmatprep.subr.mxu0 0.0
    %2303 = vmatpush1.msra.mxu0 0.0
    %2304 = vmatprep.subr.mxu0 0.0
    %2305 = vmatpush1.msra.mxu0 0.0
    %2306 = vmatprep.subr.mxu0 0.0
    %2307 = vmatpush1.msra.mxu0 0.0
    %2308 = vmatprep.subr.mxu0 0.0
    %2309 = vmatpush1.msra.mxu0 0.0
    %2310 = vmatprep.subr.mxu0 0.0
    %2311 = vmatpush1.msra.mxu0 0.0
    %2312 = vmatprep.subr.mxu0 0.0
    %2313 = vmatpush1.msra.mxu0 0.0
    %2314 = vmatprep.subr.mxu0 0.0
    %2315 = vmatpush1.msra.mxu0 0.0
    %2316 = vmatprep.subr.mxu0 0.0
    %2317 = vmatpush1.msra.mxu0 0.0
    %2318 = vmatprep.subr.mxu0 0.0
    %2319 = vmatpush1.msra.mxu0 0.0
    %2320 = vmatprep.subr.mxu0 0.0
    %2321 = vmatpush1.msra.mxu0 0.0
    %2322 = vmatprep.subr.mxu0 0.0
    %2323 = vmatpush1.msra.mxu0 0.0
    %2324 = vmatprep.subr.mxu0 0.0
    %2325 = vmatpush1.msra.mxu0 0.0
    %2326 = vmatprep.subr.mxu0 0.0
    %2327 = vmatpush1.msra.mxu0 0.0
    %2328 = vmatprep.subr.mxu0 0.0
    %2329 = vmatpush1.msra.mxu0 0.0
    %2330 = vmatprep.mubr.f32.mxu0 0.0
    %2331 = vmatmul.mubr.f32.gmra.mrb[0].mxu0 %v2264
    %v2332 = vpop.f32.mrb[0].mxu0
    %v2333 = vadd.f32 0.0, %v2332
    %v2334 = vpop.f32.mrb[0].mxu0
    %2335 = vdwg.mxu0
    %2336 = vmatprep.subr.mxu0 0.0
    %2337 = vmatpush1.msra.mxu0 %v116
    %2338 = vmatprep.subr.mxu0 0.0
    %2339 = vmatpush1.msra.mxu0 %v117
    %2340 = vmatprep.subr.mxu0 0.0
    %2341 = vmatpush1.msra.mxu0 %v118
    %2342 = vmatprep.subr.mxu0 0.0
    %2343 = vmatpush1.msra.mxu0 %v119
    %2344 = vmatprep.subr.mxu0 0.0
    %2345 = vmatpush1.msra.mxu0 %v120
    %2346 = vmatprep.subr.mxu0 0.0
    %2347 = vmatpush1.msra.mxu0 %v121
    %2348 = vmatprep.subr.mxu0 0.0
    %2349 = vmatpush1.msra.mxu0 %v122
    %2350 = vmatprep.subr.mxu0 0.0
    %2351 = vmatpush1.msra.mxu0 %v123
    %2352 = vmatprep.subr.mxu0 0.0
    %2353 = vmatpush1.msra.mxu0 %v124
    %2354 = vmatprep.subr.mxu0 0.0
    %2355 = vmatpush1.msra.mxu0 %v125
    %2356 = vmatprep.subr.mxu0 0.0
    %2357 = vmatpush1.msra.mxu0 %v126
    %2358 = vmatprep.subr.mxu0 0.0
    %2359 = vmatpush1.msra.mxu0 %v127
    %2360 = vmatprep.subr.mxu0 0.0
    %2361 = vmatpush1.msra.mxu0 %v128
    %2362 = vmatprep.subr.mxu0 0.0
    %2363 = vmatpush1.msra.mxu0 %v129
    %2364 = vmatprep.subr.mxu0 0.0
    %2365 = vmatpush1.msra.mxu0 %v130
    %2366 = vmatprep.subr.mxu0 0.0
    %2367 = vmatpush1.msra.mxu0 %v131
    %2368 = vmatprep.subr.mxu0 0.0
    %2369 = vmatpush1.msra.mxu0 0.0
    %2370 = vmatprep.subr.mxu0 0.0
    %2371 = vmatpush1.msra.mxu0 0.0
    %2372 = vmatprep.subr.mxu0 0.0
    %2373 = vmatpush1.msra.mxu0 0.0
    %2374 = vmatprep.subr.mxu0 0.0
    %2375 = vmatpush1.msra.mxu0 0.0
    %2376 = vmatprep.subr.mxu0 0.0
    %2377 = vmatpush1.msra.mxu0 0.0
    %2378 = vmatprep.subr.mxu0 0.0
    %2379 = vmatpush1.msra.mxu0 0.0
    %2380 = vmatprep.subr.mxu0 0.0
    %2381 = vmatpush1.msra.mxu0 0.0
    %2382 = vmatprep.subr.mxu0 0.0
    %2383 = vmatpush1.msra.mxu0 0.0
    %2384 = vmatprep.subr.mxu0 0.0
    %2385 = vmatpush1.msra.mxu0 0.0
    %2386 = vmatprep.subr.mxu0 0.0
    %2387 = vmatpush1.msra.mxu0 0.0
    %2388 = vmatprep.subr.mxu0 0.0
    %2389 = vmatpush1.msra.mxu0 0.0
    %2390 = vmatprep.subr.mxu0 0.0
    %2391 = vmatpush1.msra.mxu0 0.0
    %2392 = vmatprep.subr.mxu0 0.0
    %2393 = vmatpush1.msra.mxu0 0.0
    %2394 = vmatprep.subr.mxu0 0.0
    %2395 = vmatpush1.msra.mxu0 0.0
    %2396 = vmatprep.subr.mxu0 0.0
    %2397 = vmatpush1.msra.mxu0 0.0
    %2398 = vmatprep.subr.mxu0 0.0
    %2399 = vmatpush1.msra.mxu0 0.0
    %2400 = vmatprep.mubr.f32.mxu0 0.0
    %2401 = vmatmul.mubr.f32.gmra.mrb[0].mxu0 %v2333
    %v2402 = vpop.f32.mrb[0].mxu0
    %v2403 = vadd.f32 0.0, %v2402
    %v2404 = vpop.f32.mrb[0].mxu0
    %2405 = vdwg.mxu0
    %v2406 = vadd.f32 %v2181, %v2403
    %v2407 = vadd.f32 %v2406, %v1505
    %2408 = vst.msk [vmem:[#allocation2 + $0x8] sm:$0xff] %vm133, %v2407
    // Predicated region
    $region18: #{tpu_custom_call.1} parent=1 // pred_check
      _
    $region19: #{tpu_custom_call.1} parent=1 // pred_check_branch
      %2410 = sbr.rel (0) target = $region21
    $region20: #{tpu_custom_call.1} parent=1 // pred_region
      %s2412 = ssub.s32 256, 256
      %2413 = vsyncadd [#allocation3], %s2412
      %s2414 = sshll.u32 [#allocation2], 4
      %s2415 = int_to_ptr.vmem [resolvable:$true] %s2414
      %2420 = dma.vmem_to_hbm [thread:$0]  %s2415, 256, %s4, [#allocation3], 128, 128, 8
    $region21: #{tpu_custom_call.1} parent=1 // pred_fallthru
      _
    // Predicated region
    $region22: #{tpu_custom_call.1} parent=1 // pred_check
      _
    $region23: #{tpu_custom_call.1} parent=1 // pred_check_branch
      %2422 = sbr.rel (0) target = $region25
    $region24: #{tpu_custom_call.1} parent=1 // pred_region
      %2423 = dma.done [#allocation3], 256
    $region25: #{tpu_custom_call.1} parent=1 // pred_fallthru
      _
    %2424 = vsyncpa [#allocation3], 1

</llo_original>
